<compile_context>
chip_gen: v7x
topology: tpu7x:2x2x1
jax: 0.10.0
libtpu: 0.0.40
codegen_flags: <defaults>
</compile_context>

<pallas_src>
import jax
import jax.numpy as jnp
from jax.experimental import pallas as pl
from jax.experimental.pallas import tpu as pltpu


def gnat_block_pallas(x, edge_index, edge_attr, glob, batch, params):
    N, node_in = x.shape
    E, edge_in = edge_attr.shape
    B, global_in = glob.shape
    node_out = params["wn"].shape[1]
    edge_out = params["we"].shape[1]
    global_out = params["wg"].shape[1]

    f32, bf16 = jnp.float32, jnp.bfloat16

    # ---------------- wrapper-side glue (cheap XLA ops) ----------------
    # TODO(synk): hoist/cache these one-hots when edge_index/batch are reused across calls.
    s_oh = jax.nn.one_hot(edge_index[0], N, dtype=bf16)      # [E, N] source gather
    r_oh = jax.nn.one_hot(edge_index[1], N, dtype=bf16)      # [E, N] receiver gather
    r_oh_T = r_oh.T                                          # [N, E] receiver scatter (pre-transposed)
    b_oh = jax.nn.one_hot(batch, B, dtype=bf16)              # [N, B] graph gather
    b_oh_T = b_oh.T                                          # [B, N] graph scatter (pre-transposed)

    counts = jnp.zeros((B,), f32).at[batch].add(1.0)
    inv_counts = (1.0 / jnp.maximum(counts, 1.0))[:, None]   # [B, 1] scatter-mean scale

    we, be = params["we"], params["be"]
    we_s, we_a = we[:node_in], we[node_in:]
    w2, b2 = params["w2"], params["b2"]
    w2f = w2[:node_out]
    w2a = w2[node_out:node_out + edge_out]
    w2g = w2[node_out + edge_out:]
    wn, bn = params["wn"], params["bn"]
    # node_mlp and node_mlp_2 are both linear on the "feat" path (no ReLU between), so fold them:
    # feat @ w2f == x @ (wn @ w2f) + bn @ w2f.  Exact up to f32 rounding.
    w_xf = wn @ w2f                                          # [node_in, node_out]
    b2_eff = b2 + bn @ w2f                                   # [node_out]
    # Fuse all three x-LHS projections into one MXU pass: [x@we_s | x@wk | x@w_xf].
    w_x = jnp.concatenate([we_s, params["wk"], w_xf], axis=1)  # [node_in, edge_out + 2*node_out]
    wg, bg = params["wg"], params["bg"]
    wg_g, wg_m = wg[:global_in], wg[global_in:]

    inputs = (x, edge_attr, glob, s_oh, r_oh, r_oh_T, b_oh, b_oh_T, inv_counts,
              w_x, we_a, be[None, :],
              params["wc"], params["bc"][None, :], params["bk"][None, :],
              w2a, w2g, b2_eff[None, :],
              wg_g, wg_m, bg[None, :])

    # ---------------- kernel ----------------
    def kernel(x_ref, ea_ref, g_ref, s_oh_ref, r_oh_ref, r_ohT_ref, b_oh_ref, b_ohT_ref,
               invc_ref, wx_ref, we_a_ref, be_ref, wc_ref, bc_ref, bk_ref,
               w2a_ref, w2g_ref, b2_ref, wg_g_ref, wg_m_ref, bg_ref,
               x_out_ref, e_out_ref, u_out_ref):

        def mm(a, b):                       # plain f32 MXU matmul
            return jnp.dot(a, b, preferred_element_type=f32)

        def oh_mm(oh, data):                # bf16 one-hot [rows, src] @ data [src, F], f32 acc
            return jnp.dot(oh, data.astype(bf16), preferred_element_type=f32)

        xv = x_ref[...]
        gv = g_ref[...]

        # fused x projections: [x@we_s | x@wk | x@(wn@w2f)]
        # NOTE: these column slices sit inside one (8,128) lane tile at these sizes; at larger
        # node_out pad each segment of w_x to a 128-lane boundary if relayout copies appear.
        x_proj = mm(xv, wx_ref[...])                              # [N, edge_out + 2*node_out]
        xs_proj = x_proj[:, :edge_out]                            # x @ we_s
        key = x_proj[:, edge_out:edge_out + node_out] + bk_ref[...]
        x_feat2 = x_proj[:, edge_out + node_out:]                 # node_mlp folded into node_mlp_2

        # ---------------- edge model: relu(edge_mlp(cat[x[S], edge_attr])) ----------------
        src_proj = oh_mm(s_oh_ref[...], xs_proj)                  # (x @ we_s)[S]    [E, edge_out]
        e_new = jnp.maximum(src_proj + mm(ea_ref[...], we_a_ref[...]) + be_ref[...], 0.0)
        e_out_ref[...] = e_new

        # ---------------- node model: segment-softmax attention over receivers ------------
        code = mm(e_new, wc_ref[...]) + bc_ref[...]               # [E, node_out]
        key_r = oh_mm(r_oh_ref[...], key)                         # key[R]           [E, node_out]
        logits = jnp.sum(key_r * code, axis=1, keepdims=True)     # [E, 1]
        # Single GLOBAL shift: per-segment softmax is exact under any common shift, so no
        # [E,N] masked-logits temporary / per-segment max / max gather is needed.
        m = jnp.max(logits, axis=0, keepdims=True)                # [1, 1]
        exp_l = jnp.exp(logits - m)                               # [E, 1]

        # ONE fused scatter over r_oh_T: [denom | sum_R e_new*exp_l], normalized per NODE.
        scat_in = jnp.concatenate([exp_l, e_new * exp_l], axis=1)  # [E, 1 + edge_out]
        scat = oh_mm(r_ohT_ref[...], scat_in)                      # [N, 1 + edge_out]
        denom = scat[:, :1]                                        # segment sums of exp_l
        agg = scat[:, 1:] * pl.reciprocal(denom + 1e-16, approx=True)  # == scatter_add(e_new*attn)

        glob_proj = mm(gv, w2g_ref[...])                          # glob @ w2g       [B, node_out]
        glob_n = oh_mm(b_oh_ref[...], glob_proj)                  # (glob @ w2g)[batch]
        x_new = jnp.maximum(x_feat2 + mm(agg, w2a_ref[...]) + glob_n + b2_ref[...], 0.0)
        x_out_ref[...] = x_new

        # ---------------- global model -----------------------------------------------------
        mean_x = oh_mm(b_ohT_ref[...], x_new) * invc_ref[...]     # scatter_mean     [B, node_out]
        u_new = jnp.maximum(mm(gv, wg_g_ref[...]) + mm(mean_x, wg_m_ref[...]) + bg_ref[...], 0.0)
        u_out_ref[...] = u_new

    out_shape = (jax.ShapeDtypeStruct((N, node_out), f32),
                 jax.ShapeDtypeStruct((E, edge_out), f32),
                 jax.ShapeDtypeStruct((B, global_out), f32))

    vmem_spec = pl.BlockSpec(memory_space=pltpu.MemorySpace.VMEM)

    # Explicit VMEM limit sized from the actual buffers, capped at 56 MiB so there is headroom
    # under v7x's 64 MiB physical VMEM for Mosaic scratch / cast copies (16 MiB floor for v5e's
    # default scoped limit).
    io_bytes = sum(int(a.size) * a.dtype.itemsize for a in inputs)
    io_bytes += 4 * (N * node_out + E * edge_out + B * global_out)
    tmp_bytes = 4 * (N * (2 * edge_out + 3 * node_out + 2)
                     + E * (2 * edge_out + 2 * node_out + 4)
                     + B * (2 * node_out + global_out))
    vmem_limit = int(min(56 * 2**20, max(16 * 2**20, 4 * (io_bytes + tmp_bytes))))

    fn = pl.pallas_call(
        kernel,
        out_shape=out_shape,
        in_specs=[vmem_spec] * len(inputs),
        out_specs=(vmem_spec, vmem_spec, vmem_spec),
        compiler_params=pltpu.CompilerParams(vmem_limit_bytes=vmem_limit),
    )
    return fn(*inputs)


def init_params(key, node_in, edge_in, global_in, node_out, edge_out, global_out):
    def lin(k, fan_in, fan_out):
        kw, kb = jax.random.split(k)
        bound = 1.0 / jnp.sqrt(jnp.float32(fan_in))
        w = jax.random.uniform(kw, (fan_in, fan_out), jnp.float32, -bound, bound)
        b = jax.random.uniform(kb, (fan_out,), jnp.float32, -bound, bound)
        return w, b

    keys = jax.random.split(key, 6)
    we, be = lin(keys[0], node_in + edge_in, edge_out)          # edge_mlp
    wc, bc = lin(keys[1], edge_out, node_out)                   # code
    wk, bk = lin(keys[2], node_in, node_out)                    # key
    wn, bn = lin(keys[3], node_in, node_out)                    # node_mlp
    w2, b2 = lin(keys[4], 2 * node_out + global_in, node_out)   # node_mlp_2
    wg, bg = lin(keys[5], global_in + node_out, global_out)     # global_mlp
    return dict(we=we, be=be, wc=wc, bc=bc, wk=wk, bk=bk,
                wn=wn, bn=bn, w2=w2, b2=b2, wg=wg, bg=bg)


def gnat_block_ref(x, edge_index, edge_attr, glob, batch, params):
    """Pure-JAX f32 reference mirroring the PyTorch MetaLayer semantics."""
    S, R = edge_index[0], edge_index[1]
    N = x.shape[0]
    B = glob.shape[0]
    e_new = jax.nn.relu(jnp.concatenate([x[S], edge_attr], axis=1) @ params["we"] + params["be"])
    feat = x @ params["wn"] + params["bn"]
    key = x @ params["wk"] + params["bk"]
    code = e_new @ params["wc"] + params["bc"]
    logits = jnp.sum(key[R] * code, axis=1)
    seg_max = jax.ops.segment_max(logits, R, num_segments=N)
    ex = jnp.exp(logits - seg_max[R])
    denom = jax.ops.segment_sum(ex, R, num_segments=N)
    attn = ex / (denom[R] + 1e-16)
    agg = jax.ops.segment_sum(e_new * attn[:, None], R, num_segments=N)
    x_new = jax.nn.relu(
        jnp.concatenate([feat, agg, glob[batch]], axis=1) @ params["w2"] + params["b2"])
    counts = jnp.maximum(jax.ops.segment_sum(jnp.ones(N), batch, num_segments=B), 1.0)
    mean_x = jax.ops.segment_sum(x_new, batch, num_segments=B) / counts[:, None]
    u_new = jax.nn.relu(jnp.concatenate([glob, mean_x], axis=1) @ params["wg"] + params["bg"])
    return x_new, e_new, u_new


if __name__ == "__main__":
    # Module hyperparameters (hid is unused by the forward pass, kept for signature parity).
    node_in, edge_in, global_in = 8, 8, 8
    hid = 32
    node_out, edge_out, global_out = 16, 16, 8   # edge_out == node_out (required by node_mlp_2 concat)
    N, E, B = 16, 32, 2

    root = jax.random.PRNGKey(0)
    k_p, k_x, k_e, k_g, k_s, k_r = jax.random.split(root, 6)
    params = init_params(k_p, node_in, edge_in, global_in, node_out, edge_out, global_out)

    x = jax.random.normal(k_x, (N, node_in), jnp.float32)
    edge_attr = jax.random.normal(k_e, (E, edge_in), jnp.float32)
    glob = jax.random.normal(k_g, (B, global_in), jnp.float32)
    src = jax.random.randint(k_s, (E,), 0, N)
    dst = jax.random.randint(k_r, (E,), 0, N)
    edge_index = jnp.stack([src, dst], axis=0)                   # [2, E]
    batch = jnp.repeat(jnp.arange(B, dtype=jnp.int32), N // B)   # node -> graph id

    x_new, e_new, u_new = jax.block_until_ready(
        gnat_block_pallas(x, edge_index, edge_attr, glob, batch, params))

    xr, er, ur = gnat_block_ref(x, edge_index, edge_attr, glob, batch, params)
    # Tolerances cover the bf16 rounding on the one-hot gather/scatter MXU path (each value passes
    # through at most one bf16 rounding; accumulation and normalization stay in f32).
    assert jnp.allclose(e_new, er, atol=2e-2, rtol=2e-2)
    assert jnp.allclose(x_new, xr, atol=2e-2, rtol=2e-2)
    assert jnp.allclose(u_new, ur, atol=2e-2, rtol=2e-2)
    print("KERNEL_OK")
</pallas_src>

<mosaic_0001>
module attributes {stable_mosaic.version = 11 : i64} {
  func.func @kernel(%arg0: memref<16x8xf32, #tpu.memory_space<vmem>>, %arg1: memref<32x8xf32, #tpu.memory_space<vmem>>, %arg2: memref<2x8xf32, #tpu.memory_space<vmem>>, %arg3: memref<32x16xbf16, #tpu.memory_space<vmem>>, %arg4: memref<32x16xbf16, #tpu.memory_space<vmem>>, %arg5: memref<16x32xbf16, #tpu.memory_space<vmem>>, %arg6: memref<16x2xbf16, #tpu.memory_space<vmem>>, %arg7: memref<2x16xbf16, #tpu.memory_space<vmem>>, %arg8: memref<2x1xf32, #tpu.memory_space<vmem>>, %arg9: memref<8x48xf32, #tpu.memory_space<vmem>>, %arg10: memref<8x16xf32, #tpu.memory_space<vmem>>, %arg11: memref<1x16xf32, #tpu.memory_space<vmem>>, %arg12: memref<16x16xf32, #tpu.memory_space<vmem>>, %arg13: memref<1x16xf32, #tpu.memory_space<vmem>>, %arg14: memref<1x16xf32, #tpu.memory_space<vmem>>, %arg15: memref<16x16xf32, #tpu.memory_space<vmem>>, %arg16: memref<8x16xf32, #tpu.memory_space<vmem>>, %arg17: memref<1x16xf32, #tpu.memory_space<vmem>>, %arg18: memref<8x8xf32, #tpu.memory_space<vmem>>, %arg19: memref<16x8xf32, #tpu.memory_space<vmem>>, %arg20: memref<1x8xf32, #tpu.memory_space<vmem>>, %arg21: memref<16x16xf32, #tpu.memory_space<vmem>>, %arg22: memref<32x16xf32, #tpu.memory_space<vmem>>, %arg23: memref<2x8xf32, #tpu.memory_space<vmem>>) attributes {dimension_semantics = [], scalar_prefetch = 0 : i64, scratch_operands = 0 : i64, tpu.core_type = #tpu.core_type<tc>} {
    %c0 = arith.constant 0 : index
    %c0_0 = arith.constant 0 : index
    %0 = vector.load %arg0[%c0, %c0_0] : memref<16x8xf32, #tpu.memory_space<vmem>>, vector<16x8xf32>
    %c0_1 = arith.constant 0 : index
    %c0_2 = arith.constant 0 : index
    %1 = vector.load %arg2[%c0_1, %c0_2] : memref<2x8xf32, #tpu.memory_space<vmem>>, vector<2x8xf32>
    %c0_3 = arith.constant 0 : index
    %c0_4 = arith.constant 0 : index
    %2 = vector.load %arg9[%c0_3, %c0_4] : memref<8x48xf32, #tpu.memory_space<vmem>>, vector<8x48xf32>
    %cst = arith.constant dense<0.000000e+00> : vector<16x48xf32>
    %3 = tpu.matmul %0, %2, %cst {dimension_numbers = #tpu.dot_dimension_numbers<[1], [0], [0], [1], [0, 0, 1, 1], [], []>} : vector<16x8xf32>, vector<8x48xf32>, vector<16x48xf32> -> vector<16x48xf32>
    %4 = vector.extract_strided_slice %3 {offsets = [0, 0], sizes = [16, 16], strides = [1, 1]} : vector<16x48xf32> to vector<16x16xf32>
    %5 = vector.extract_strided_slice %3 {offsets = [0, 16], sizes = [16, 16], strides = [1, 1]} : vector<16x48xf32> to vector<16x16xf32>
    %c0_5 = arith.constant 0 : index
    %c0_6 = arith.constant 0 : index
    %6 = vector.load %arg14[%c0_5, %c0_6] : memref<1x16xf32, #tpu.memory_space<vmem>>, vector<1x16xf32>
    %7 = vector.broadcast %6 : vector<1x16xf32> to vector<16x16xf32>
    %8 = arith.addf %5, %7 : vector<16x16xf32>
    %9 = vector.extract_strided_slice %3 {offsets = [0, 32], sizes = [16, 16], strides = [1, 1]} : vector<16x48xf32> to vector<16x16xf32>
    %c0_7 = arith.constant 0 : index
    %c0_8 = arith.constant 0 : index
    %10 = vector.load %arg3[%c0_7, %c0_8] : memref<32x16xbf16, #tpu.memory_space<vmem>>, vector<32x16xbf16>
    %11 = arith.truncf %4 : vector<16x16xf32> to vector<16x16xbf16>
    %cst_9 = arith.constant dense<0.000000e+00> : vector<32x16xf32>
    %12 = tpu.matmul %10, %11, %cst_9 {dimension_numbers = #tpu.dot_dimension_numbers<[1], [0], [0], [1], [0, 0, 1, 1], [], []>} : vector<32x16xbf16>, vector<16x16xbf16>, vector<32x16xf32> -> vector<32x16xf32>
    %c0_10 = arith.constant 0 : index
    %c0_11 = arith.constant 0 : index
    %13 = vector.load %arg1[%c0_10, %c0_11] : memref<32x8xf32, #tpu.memory_space<vmem>>, vector<32x8xf32>
    %c0_12 = arith.constant 0 : index
    %c0_13 = arith.constant 0 : index
    %14 = vector.load %arg10[%c0_12, %c0_13] : memref<8x16xf32, #tpu.memory_space<vmem>>, vector<8x16xf32>
    %cst_14 = arith.constant dense<0.000000e+00> : vector<32x16xf32>
    %15 = tpu.matmul %13, %14, %cst_14 {dimension_numbers = #tpu.dot_dimension_numbers<[1], [0], [0], [1], [0, 0, 1, 1], [], []>} : vector<32x8xf32>, vector<8x16xf32>, vector<32x16xf32> -> vector<32x16xf32>
    %16 = arith.addf %12, %15 : vector<32x16xf32>
    %c0_15 = arith.constant 0 : index
    %c0_16 = arith.constant 0 : index
    %17 = vector.load %arg11[%c0_15, %c0_16] : memref<1x16xf32, #tpu.memory_space<vmem>>, vector<1x16xf32>
    %18 = vector.broadcast %17 : vector<1x16xf32> to vector<32x16xf32>
    %19 = arith.addf %16, %18 : vector<32x16xf32>
    %cst_17 = arith.constant 0.000000e+00 : f32
    %20 = vector.broadcast %cst_17 : f32 to vector<32x16xf32>
    %21 = arith.maximumf %19, %20 : vector<32x16xf32>
    %c0_18 = arith.constant 0 : index
    %c0_19 = arith.constant 0 : index
    %22 = vector.load %arg22[%c0_18, %c0_19] : memref<32x16xf32, #tpu.memory_space<vmem>>, vector<32x16xf32>
    tpu.vector_store %arg22[%c0_18, %c0_19], %21 {strides = array<i32>} : memref<32x16xf32, #tpu.memory_space<vmem>>, vector<32x16xf32>,
    %c0_20 = arith.constant 0 : index
    %c0_21 = arith.constant 0 : index
    %23 = vector.load %arg12[%c0_20, %c0_21] : memref<16x16xf32, #tpu.memory_space<vmem>>, vector<16x16xf32>
    %cst_22 = arith.constant dense<0.000000e+00> : vector<32x16xf32>
    %24 = tpu.matmul %21, %23, %cst_22 {dimension_numbers = #tpu.dot_dimension_numbers<[1], [0], [0], [1], [0, 0, 1, 1], [], []>} : vector<32x16xf32>, vector<16x16xf32>, vector<32x16xf32> -> vector<32x16xf32>
    %c0_23 = arith.constant 0 : index
    %c0_24 = arith.constant 0 : index
    %25 = vector.load %arg13[%c0_23, %c0_24] : memref<1x16xf32, #tpu.memory_space<vmem>>, vector<1x16xf32>
    %26 = vector.broadcast %25 : vector<1x16xf32> to vector<32x16xf32>
    %27 = arith.addf %24, %26 : vector<32x16xf32>
    %c0_25 = arith.constant 0 : index
    %c0_26 = arith.constant 0 : index
    %28 = vector.load %arg4[%c0_25, %c0_26] : memref<32x16xbf16, #tpu.memory_space<vmem>>, vector<32x16xbf16>
    %29 = arith.truncf %8 : vector<16x16xf32> to vector<16x16xbf16>
    %cst_27 = arith.constant dense<0.000000e+00> : vector<32x16xf32>
    %30 = tpu.matmul %28, %29, %cst_27 {dimension_numbers = #tpu.dot_dimension_numbers<[1], [0], [0], [1], [0, 0, 1, 1], [], []>} : vector<32x16xbf16>, vector<16x16xbf16>, vector<32x16xf32> -> vector<32x16xf32>
    %31 = arith.mulf %30, %27 : vector<32x16xf32>
    %cst_28 = arith.constant dense<0.000000e+00> : vector<32xf32>
    %32 = vector.multi_reduction <add>, %31, %cst_28 [1] : vector<32x16xf32> to vector<32xf32>
    %33 = vector.shape_cast %32 : vector<32xf32> to vector<32x1xf32>
    %cst_29 = arith.constant dense<0xFF800000> : vector<1xf32>
    %34 = vector.multi_reduction <maximumf>, %33, %cst_29 [0] : vector<32x1xf32> to vector<1xf32>
    %35 = vector.shape_cast %34 : vector<1xf32> to vector<1x1xf32>
    %36 = vector.broadcast %35 : vector<1x1xf32> to vector<32x1xf32>
    %37 = arith.subf %33, %36 : vector<32x1xf32>
    %38 = math.exp %37 : vector<32x1xf32>
    %39 = vector.broadcast %38 : vector<32x1xf32> to vector<32x16xf32>
    %40 = arith.mulf %21, %39 : vector<32x16xf32>
    %41 = tpu.concatenate %38, %40 in 1 : vector<32x1xf32>, vector<32x16xf32> -> vector<32x17xf32>
    %c0_30 = arith.constant 0 : index
    %c0_31 = arith.constant 0 : index
    %42 = vector.load %arg5[%c0_30, %c0_31] : memref<16x32xbf16, #tpu.memory_space<vmem>>, vector<16x32xbf16>
    %43 = arith.truncf %41 : vector<32x17xf32> to vector<32x17xbf16>
    %cst_32 = arith.constant dense<0.000000e+00> : vector<16x17xf32>
    %44 = tpu.matmul %42, %43, %cst_32 {dimension_numbers = #tpu.dot_dimension_numbers<[1], [0], [0], [1], [0, 0, 1, 1], [], []>} : vector<16x32xbf16>, vector<32x17xbf16>, vector<16x17xf32> -> vector<16x17xf32>
    %45 = vector.extract_strided_slice %44 {offsets = [0, 0], sizes = [16, 1], strides = [1, 1]} : vector<16x17xf32> to vector<16x1xf32>
    %46 = vector.extract_strided_slice %44 {offsets = [0, 1], sizes = [16, 16], strides = [1, 1]} : vector<16x17xf32> to vector<16x16xf32>
    %cst_33 = arith.constant 1.000000e-16 : f32
    %47 = vector.broadcast %cst_33 : f32 to vector<16x1xf32>
    %48 = arith.addf %45, %47 : vector<16x1xf32>
    %49 = tpu.reciprocal %48 {approx = true} : vector<16x1xf32> -> vector<16x1xf32>
    %50 = vector.broadcast %49 : vector<16x1xf32> to vector<16x16xf32>
    %51 = arith.mulf %46, %50 : vector<16x16xf32>
    %c0_34 = arith.constant 0 : index
    %c0_35 = arith.constant 0 : index
    %52 = vector.load %arg16[%c0_34, %c0_35] : memref<8x16xf32, #tpu.memory_space<vmem>>, vector<8x16xf32>
    %cst_36 = arith.constant dense<0.000000e+00> : vector<2x16xf32>
    %53 = tpu.matmul %1, %52, %cst_36 {dimension_numbers = #tpu.dot_dimension_numbers<[1], [0], [0], [1], [0, 0, 1, 1], [], []>} : vector<2x8xf32>, vector<8x16xf32>, vector<2x16xf32> -> vector<2x16xf32>
    %c0_37 = arith.constant 0 : index
    %c0_38 = arith.constant 0 : index
    %54 = vector.load %arg6[%c0_37, %c0_38] : memref<16x2xbf16, #tpu.memory_space<vmem>>, vector<16x2xbf16>
    %55 = arith.truncf %53 : vector<2x16xf32> to vector<2x16xbf16>
    %cst_39 = arith.constant dense<0.000000e+00> : vector<16x16xf32>
    %56 = tpu.matmul %54, %55, %cst_39 {dimension_numbers = #tpu.dot_dimension_numbers<[1], [0], [0], [1], [0, 0, 1, 1], [], []>} : vector<16x2xbf16>, vector<2x16xbf16>, vector<16x16xf32> -> vector<16x16xf32>
    %c0_40 = arith.constant 0 : index
    %c0_41 = arith.constant 0 : index
    %57 = vector.load %arg15[%c0_40, %c0_41] : memref<16x16xf32, #tpu.memory_space<vmem>>, vector<16x16xf32>
    %cst_42 = arith.constant dense<0.000000e+00> : vector<16x16xf32>
    %58 = tpu.matmul %51, %57, %cst_42 {dimension_numbers = #tpu.dot_dimension_numbers<[1], [0], [0], [1], [0, 0, 1, 1], [], []>} : vector<16x16xf32>, vector<16x16xf32>, vector<16x16xf32> -> vector<16x16xf32>
    %59 = arith.addf %9, %58 : vector<16x16xf32>
    %60 = arith.addf %59, %56 : vector<16x16xf32>
    %c0_43 = arith.constant 0 : index
    %c0_44 = arith.constant 0 : index
    %61 = vector.load %arg17[%c0_43, %c0_44] : memref<1x16xf32, #tpu.memory_space<vmem>>, vector<1x16xf32>
    %62 = vector.broadcast %61 : vector<1x16xf32> to vector<16x16xf32>
    %63 = arith.addf %60, %62 : vector<16x16xf32>
    %cst_45 = arith.constant 0.000000e+00 : f32
    %64 = vector.broadcast %cst_45 : f32 to vector<16x16xf32>
    %65 = arith.maximumf %63, %64 : vector<16x16xf32>
    %c0_46 = arith.constant 0 : index
    %c0_47 = arith.constant 0 : index
    %66 = vector.load %arg21[%c0_46, %c0_47] : memref<16x16xf32, #tpu.memory_space<vmem>>, vector<16x16xf32>
    tpu.vector_store %arg21[%c0_46, %c0_47], %65 {strides = array<i32>} : memref<16x16xf32, #tpu.memory_space<vmem>>, vector<16x16xf32>,
    %c0_48 = arith.constant 0 : index
    %c0_49 = arith.constant 0 : index
    %67 = vector.load %arg7[%c0_48, %c0_49] : memref<2x16xbf16, #tpu.memory_space<vmem>>, vector<2x16xbf16>
    %68 = arith.truncf %65 : vector<16x16xf32> to vector<16x16xbf16>
    %cst_50 = arith.constant dense<0.000000e+00> : vector<2x16xf32>
    %69 = tpu.matmul %67, %68, %cst_50 {dimension_numbers = #tpu.dot_dimension_numbers<[1], [0], [0], [1], [0, 0, 1, 1], [], []>} : vector<2x16xbf16>, vector<16x16xbf16>, vector<2x16xf32> -> vector<2x16xf32>
    %c0_51 = arith.constant 0 : index
    %c0_52 = arith.constant 0 : index
    %70 = vector.load %arg8[%c0_51, %c0_52] : memref<2x1xf32, #tpu.memory_space<vmem>>, vector<2x1xf32>
    %71 = vector.broadcast %70 : vector<2x1xf32> to vector<2x16xf32>
    %72 = arith.mulf %69, %71 : vector<2x16xf32>
    %c0_53 = arith.constant 0 : index
    %c0_54 = arith.constant 0 : index
    %73 = vector.load %arg18[%c0_53, %c0_54] : memref<8x8xf32, #tpu.memory_space<vmem>>, vector<8x8xf32>
    %cst_55 = arith.constant dense<0.000000e+00> : vector<2x8xf32>
    %74 = tpu.matmul %1, %73, %cst_55 {dimension_numbers = #tpu.dot_dimension_numbers<[1], [0], [0], [1], [0, 0, 1, 1], [], []>} : vector<2x8xf32>, vector<8x8xf32>, vector<2x8xf32> -> vector<2x8xf32>
    %c0_56 = arith.constant 0 : index
    %c0_57 = arith.constant 0 : index
    %75 = vector.load %arg19[%c0_56, %c0_57] : memref<16x8xf32, #tpu.memory_space<vmem>>, vector<16x8xf32>
    %cst_58 = arith.constant dense<0.000000e+00> : vector<2x8xf32>
    %76 = tpu.matmul %72, %75, %cst_58 {dimension_numbers = #tpu.dot_dimension_numbers<[1], [0], [0], [1], [0, 0, 1, 1], [], []>} : vector<2x16xf32>, vector<16x8xf32>, vector<2x8xf32> -> vector<2x8xf32>
    %77 = arith.addf %74, %76 : vector<2x8xf32>
    %c0_59 = arith.constant 0 : index
    %c0_60 = arith.constant 0 : index
    %78 = vector.load %arg20[%c0_59, %c0_60] : memref<1x8xf32, #tpu.memory_space<vmem>>, vector<1x8xf32>
    %79 = vector.broadcast %78 : vector<1x8xf32> to vector<2x8xf32>
    %80 = arith.addf %77, %79 : vector<2x8xf32>
    %cst_61 = arith.constant 0.000000e+00 : f32
    %81 = vector.broadcast %cst_61 : f32 to vector<2x8xf32>
    %82 = arith.maximumf %80, %81 : vector<2x8xf32>
    %c0_62 = arith.constant 0 : index
    %c0_63 = arith.constant 0 : index
    %83 = vector.load %arg23[%c0_62, %c0_63] : memref<2x8xf32, #tpu.memory_space<vmem>>, vector<2x8xf32>
    tpu.vector_store %arg23[%c0_62, %c0_63], %82 {strides = array<i32>} : memref<2x8xf32, #tpu.memory_space<vmem>>, vector<2x8xf32>,
    return
  }
}

</mosaic_0001>

<llo_original>
// kernel: tpu_custom_call.1
$region0: #{tpu_custom_call.1}
  #allocation0 [shape = 'u32[]', space=smem, size = 0x4, offset = 0x4, fixed_abs, tag = 'smem constant byte address 0x4 - core index']
  #allocation1 [shape = 'u32[144,128]{1,0:T(1,128)}', space=vmem, size = 0x12000, scoped, tag = 'internal scratch']
  %s0 = inlined_call_operand.vmem [shape: f32[16,8], index: 0, kind: input, shape index: {}]
  %s1 = inlined_call_operand.vmem [shape: f32[32,8], index: 1, kind: input, shape index: {}]
  %s2 = inlined_call_operand.vmem [shape: f32[2,8], index: 2, kind: input, shape index: {}]
  %s3 = inlined_call_operand.vmem [shape: bf16[32,16], index: 3, kind: input, shape index: {}]
  %s4 = inlined_call_operand.vmem [shape: bf16[32,16], index: 4, kind: input, shape index: {}]
  %s5 = inlined_call_operand.vmem [shape: bf16[16,32], index: 5, kind: input, shape index: {}]
  %s6 = inlined_call_operand.vmem [shape: bf16[16,2], index: 6, kind: input, shape index: {}]
  %s7 = inlined_call_operand.vmem [shape: bf16[2,16], index: 7, kind: input, shape index: {}]
  %s8 = inlined_call_operand.vmem [shape: f32[2,1], index: 8, kind: input, shape index: {}]
  %s9 = inlined_call_operand.vmem [shape: f32[8,48], index: 9, kind: input, shape index: {}]
  %s10 = inlined_call_operand.vmem [shape: f32[8,16], index: 10, kind: input, shape index: {}]
  %s11 = inlined_call_operand.vmem [shape: f32[1,16], index: 11, kind: input, shape index: {}]
  %s12 = inlined_call_operand.vmem [shape: f32[16,16], index: 12, kind: input, shape index: {}]
  %s13 = inlined_call_operand.vmem [shape: f32[1,16], index: 13, kind: input, shape index: {}]
  %s14 = inlined_call_operand.vmem [shape: f32[1,16], index: 14, kind: input, shape index: {}]
  %s15 = inlined_call_operand.vmem [shape: f32[16,16], index: 15, kind: input, shape index: {}]
  %s16 = inlined_call_operand.vmem [shape: f32[8,16], index: 16, kind: input, shape index: {}]
  %s17 = inlined_call_operand.vmem [shape: f32[1,16], index: 17, kind: input, shape index: {}]
  %s18 = inlined_call_operand.vmem [shape: f32[8,8], index: 18, kind: input, shape index: {}]
  %s19 = inlined_call_operand.vmem [shape: f32[16,8], index: 19, kind: input, shape index: {}]
  %s20 = inlined_call_operand.vmem [shape: f32[1,8], index: 20, kind: input, shape index: {}]
  %s21 = inlined_call_operand.hbm [shape: f32[16,16], index: 21, kind: output, shape index: {0}]
  %s22 = inlined_call_operand.vmem [shape: f32[32,16], index: 22, kind: output, shape index: {1}]
  %s23 = inlined_call_operand.hbm [shape: f32[2,8], index: 23, kind: output, shape index: {2}]
  %24 = xla_tuple %s21, %s22, %s23
  %s25 = sld [smem:[#allocation0]]
  $region110: #{tpu_custom_call.1} parent=0
    _
  %s27 = ssub.s32 1, %s25
  %s28 = scalar_select 0, %s27, %s25
  $region1: #{tpu_custom_call.1} parent=0
    #allocation2 [shape = 'u8[8192]{0}', space=vmem, size = 0x2000, scoped, tag = 'output window, operand 0, single buffered']
    #allocation3 [shape = 's32[1]{0}', space=sflag, size = 0x4, scoped, tag = 'scoped memory for tpu_custom_call.1']
    #allocation4 [shape = 'u8[1024]{0}', space=vmem, size = 0x400, scoped, tag = 'output window, operand 2, single buffered']
    #allocation5 [shape = 's32[1]{0}', space=sflag, size = 0x4, scoped, tag = 'scoped memory for tpu_custom_call.1']
    %29 = vsyncpa [#allocation3], 0
    %30 = vsyncpa [#allocation5], 0
    // Predicated region
    $region2: #{tpu_custom_call.1} parent=1 // pred_check
      _
    $region3: #{tpu_custom_call.1} parent=1 // pred_check_branch
      %32 = sbr.rel (0) target = $region5
    $region4: #{tpu_custom_call.1} parent=1 // pred_region
      _
    $region5: #{tpu_custom_call.1} parent=1 // pred_fallthru
      _
    // Predicated region
    $region6: #{tpu_custom_call.1} parent=1 // pred_check
      _
    $region7: #{tpu_custom_call.1} parent=1 // pred_check_branch
      %34 = sbr.rel (0) target = $region9
    $region8: #{tpu_custom_call.1} parent=1 // pred_region
      _
    $region9: #{tpu_custom_call.1} parent=1 // pred_fallthru
      _
    // Predicated region
    $region10: #{tpu_custom_call.1} parent=1 // pred_check
      _
    $region11: #{tpu_custom_call.1} parent=1 // pred_check_branch
      %36 = sbr.rel (0) target = $region13
    $region12: #{tpu_custom_call.1} parent=1 // pred_region
      _
    $region13: #{tpu_custom_call.1} parent=1 // pred_fallthru
      _
    // Predicated region
    $region14: #{tpu_custom_call.1} parent=1 // pred_check
      _
    $region15: #{tpu_custom_call.1} parent=1 // pred_check_branch
      %38 = sbr.rel (0) target = $region17
    $region16: #{tpu_custom_call.1} parent=1 // pred_region
      _
    $region17: #{tpu_custom_call.1} parent=1 // pred_fallthru
      _
    // Predicated region
    $region18: #{tpu_custom_call.1} parent=1 // pred_check
      _
    $region19: #{tpu_custom_call.1} parent=1 // pred_check_branch
      %40 = sbr.rel (0) target = $region21
    $region20: #{tpu_custom_call.1} parent=1 // pred_region
      _
    $region21: #{tpu_custom_call.1} parent=1 // pred_fallthru
      _
    // Predicated region
    $region22: #{tpu_custom_call.1} parent=1 // pred_check
      _
    $region23: #{tpu_custom_call.1} parent=1 // pred_check_branch
      %42 = sbr.rel (0) target = $region25
    $region24: #{tpu_custom_call.1} parent=1 // pred_region
      _
    $region25: #{tpu_custom_call.1} parent=1 // pred_fallthru
      _
    // Predicated region
    $region26: #{tpu_custom_call.1} parent=1 // pred_check
      _
    $region27: #{tpu_custom_call.1} parent=1 // pred_check_branch
      %44 = sbr.rel (0) target = $region29
    $region28: #{tpu_custom_call.1} parent=1 // pred_region
      _
    $region29: #{tpu_custom_call.1} parent=1 // pred_fallthru
      _
    // Predicated region
    $region30: #{tpu_custom_call.1} parent=1 // pred_check
      _
    $region31: #{tpu_custom_call.1} parent=1 // pred_check_branch
      %46 = sbr.rel (0) target = $region33
    $region32: #{tpu_custom_call.1} parent=1 // pred_region
      _
    $region33: #{tpu_custom_call.1} parent=1 // pred_fallthru
      _
    // Predicated region
    $region34: #{tpu_custom_call.1} parent=1 // pred_check
      _
    $region35: #{tpu_custom_call.1} parent=1 // pred_check_branch
      %48 = sbr.rel (0) target = $region37
    $region36: #{tpu_custom_call.1} parent=1 // pred_region
      _
    $region37: #{tpu_custom_call.1} parent=1 // pred_fallthru
      _
    // Predicated region
    $region38: #{tpu_custom_call.1} parent=1 // pred_check
      _
    $region39: #{tpu_custom_call.1} parent=1 // pred_check_branch
      %50 = sbr.rel (0) target = $region41
    $region40: #{tpu_custom_call.1} parent=1 // pred_region
      _
    $region41: #{tpu_custom_call.1} parent=1 // pred_fallthru
      _
    // Predicated region
    $region42: #{tpu_custom_call.1} parent=1 // pred_check
      _
    $region43: #{tpu_custom_call.1} parent=1 // pred_check_branch
      %52 = sbr.rel (0) target = $region45
    $region44: #{tpu_custom_call.1} parent=1 // pred_region
      _
    $region45: #{tpu_custom_call.1} parent=1 // pred_fallthru
      _
    // Predicated region
    $region46: #{tpu_custom_call.1} parent=1 // pred_check
      _
    $region47: #{tpu_custom_call.1} parent=1 // pred_check_branch
      %54 = sbr.rel (0) target = $region49
    $region48: #{tpu_custom_call.1} parent=1 // pred_region
      _
    $region49: #{tpu_custom_call.1} parent=1 // pred_fallthru
      _
    // Predicated region
    $region50: #{tpu_custom_call.1} parent=1 // pred_check
      _
    $region51: #{tpu_custom_call.1} parent=1 // pred_check_branch
      %56 = sbr.rel (0) target = $region53
    $region52: #{tpu_custom_call.1} parent=1 // pred_region
      _
    $region53: #{tpu_custom_call.1} parent=1 // pred_fallthru
      _
    // Predicated region
    $region54: #{tpu_custom_call.1} parent=1 // pred_check
      _
    $region55: #{tpu_custom_call.1} parent=1 // pred_check_branch
      %58 = sbr.rel (0) target = $region57
    $region56: #{tpu_custom_call.1} parent=1 // pred_region
      _
    $region57: #{tpu_custom_call.1} parent=1 // pred_fallthru
      _
    // Predicated region
    $region58: #{tpu_custom_call.1} parent=1 // pred_check
      _
    $region59: #{tpu_custom_call.1} parent=1 // pred_check_branch
      %60 = sbr.rel (0) target = $region61
    $region60: #{tpu_custom_call.1} parent=1 // pred_region
      _
    $region61: #{tpu_custom_call.1} parent=1 // pred_fallthru
      _
    // Predicated region
    $region62: #{tpu_custom_call.1} parent=1 // pred_check
      _
    $region63: #{tpu_custom_call.1} parent=1 // pred_check_branch
      %62 = sbr.rel (0) target = $region65
    $region64: #{tpu_custom_call.1} parent=1 // pred_region
      _
    $region65: #{tpu_custom_call.1} parent=1 // pred_fallthru
      _
    // Predicated region
    $region66: #{tpu_custom_call.1} parent=1 // pred_check
      _
    $region67: #{tpu_custom_call.1} parent=1 // pred_check_branch
      %64 = sbr.rel (0) target = $region69
    $region68: #{tpu_custom_call.1} parent=1 // pred_region
      _
    $region69: #{tpu_custom_call.1} parent=1 // pred_fallthru
      _
    // Predicated region
    $region70: #{tpu_custom_call.1} parent=1 // pred_check
      _
    $region71: #{tpu_custom_call.1} parent=1 // pred_check_branch
      %66 = sbr.rel (0) target = $region73
    $region72: #{tpu_custom_call.1} parent=1 // pred_region
      _
    $region73: #{tpu_custom_call.1} parent=1 // pred_fallthru
      _
    // Predicated region
    $region74: #{tpu_custom_call.1} parent=1 // pred_check
      _
    $region75: #{tpu_custom_call.1} parent=1 // pred_check_branch
      %68 = sbr.rel (0) target = $region77
    $region76: #{tpu_custom_call.1} parent=1 // pred_region
      _
    $region77: #{tpu_custom_call.1} parent=1 // pred_fallthru
      _
    // Predicated region
    $region78: #{tpu_custom_call.1} parent=1 // pred_check
      _
    $region79: #{tpu_custom_call.1} parent=1 // pred_check_branch
      %70 = sbr.rel (0) target = $region81
    $region80: #{tpu_custom_call.1} parent=1 // pred_region
      _
    $region81: #{tpu_custom_call.1} parent=1 // pred_fallthru
      _
    // Predicated region
    $region82: #{tpu_custom_call.1} parent=1 // pred_check
      _
    $region83: #{tpu_custom_call.1} parent=1 // pred_check_branch
      %72 = sbr.rel (0) target = $region85
    $region84: #{tpu_custom_call.1} parent=1 // pred_region
      _
    $region85: #{tpu_custom_call.1} parent=1 // pred_fallthru
      _
    %v74 = vld [vmem:[%s0] sm:$0xff]
    %v75 = vld [vmem:[%s0 + $0x8] sm:$0xff]
    %v76 = vld [vmem:[%s2] sm:$0x3]
    %v77 = vld [vmem:[%s9] sm:$0xff]
    %vm78 = vcmask 64512
    %v80 = vsel %vm78, %v74, 0
    %v83 = vsel %vm78, %v75, 0
    %85 = vmatprep.subr.mxu0 0.0
    %86 = vmatpush1.msra.mxu0 %v77
    %87 = vmatprep.subr.mxu0 0.0
    %88 = vmatpush1.msra.mxu0 0.0
    %89 = vmatprep.subr.mxu0 0.0
    %90 = vmatpush1.msra.mxu0 0.0
    %91 = vmatprep.subr.mxu0 0.0
    %92 = vmatpush1.msra.mxu0 0.0
    %93 = vmatprep.subr.mxu0 0.0
    %94 = vmatpush1.msra.mxu0 0.0
    %95 = vmatprep.subr.mxu0 0.0
    %96 = vmatpush1.msra.mxu0 0.0
    %97 = vmatprep.subr.mxu0 0.0
    %98 = vmatpush1.msra.mxu0 0.0
    %99 = vmatprep.subr.mxu0 0.0
    %100 = vmatpush1.msra.mxu0 0.0
    %101 = vmatprep.subr.mxu0 0.0
    %102 = vmatpush1.msra.mxu0 0.0
    %103 = vmatprep.subr.mxu0 0.0
    %104 = vmatpush1.msra.mxu0 0.0
    %105 = vmatprep.subr.mxu0 0.0
    %106 = vmatpush1.msra.mxu0 0.0
    %107 = vmatprep.subr.mxu0 0.0
    %108 = vmatpush1.msra.mxu0 0.0
    %109 = vmatprep.subr.mxu0 0.0
    %110 = vmatpush1.msra.mxu0 0.0
    %111 = vmatprep.subr.mxu0 0.0
    %112 = vmatpush1.msra.mxu0 0.0
    %113 = vmatprep.subr.mxu0 0.0
    %114 = vmatpush1.msra.mxu0 0.0
    %115 = vmatprep.subr.mxu0 0.0
    %116 = vmatpush1.msra.mxu0 0.0
    %117 = vmatprep.subr.mxu0 0.0
    %118 = vmatpush1.msra.mxu0 0.0
    %119 = vmatprep.subr.mxu0 0.0
    %120 = vmatpush1.msra.mxu0 0.0
    %121 = vmatprep.subr.mxu0 0.0
    %122 = vmatpush1.msra.mxu0 0.0
    %123 = vmatprep.subr.mxu0 0.0
    %124 = vmatpush1.msra.mxu0 0.0
    %125 = vmatprep.subr.mxu0 0.0
    %126 = vmatpush1.msra.mxu0 0.0
    %127 = vmatprep.subr.mxu0 0.0
    %128 = vmatpush1.msra.mxu0 0.0
    %129 = vmatprep.subr.mxu0 0.0
    %130 = vmatpush1.msra.mxu0 0.0
    %131 = vmatprep.subr.mxu0 0.0
    %132 = vmatpush1.msra.mxu0 0.0
    %133 = vmatprep.subr.mxu0 0.0
    %134 = vmatpush1.msra.mxu0 0.0
    %135 = vmatprep.subr.mxu0 0.0
    %136 = vmatpush1.msra.mxu0 0.0
    %137 = vmatprep.subr.mxu0 0.0
    %138 = vmatpush1.msra.mxu0 0.0
    %139 = vmatprep.subr.mxu0 0.0
    %140 = vmatpush1.msra.mxu0 0.0
    %141 = vmatprep.subr.mxu0 0.0
    %142 = vmatpush1.msra.mxu0 0.0
    %143 = vmatprep.subr.mxu0 0.0
    %144 = vmatpush1.msra.mxu0 0.0
    %145 = vmatprep.subr.mxu0 0.0
    %146 = vmatpush1.msra.mxu0 0.0
    %147 = vmatprep.subr.mxu0 0.0
    %148 = vmatpush1.msra.mxu0 0.0
    %149 = vmatprep.mubr.f32.mxu0 0.0
    %150 = vmatmul.mubr.f32.gmra.mrb[0].mxu0 %v80
    %v151 = vpop.f32.mrb[0].mxu0
    %v152 = vadd.f32 0.0, %v151
    %v153 = vpop.f32.mrb[0].mxu0
    %154 = vmatprep.mubr.f32.mxu0 0.0
    %155 = vmatmul.mubr.f32.gmra.mrb[0].mxu0 %v83
    %v156 = vpop.f32.mrb[0].mxu0
    %v157 = vadd.f32 0.0, %v156
    %v158 = vpop.f32.mrb[0].mxu0
    %159 = vdwg.mxu0
    %v160 = vld [vmem:[%s14] sm:$0x1]
    %v162 = vlaneseq
    %v163 = vshrl.u32 %v162, 7
    %v164 = vsub.s32 0, %v163
    %v165 = vrot.slane %v160, %v164
    %166 = vrot.lane.b32.xlu0 %v165, 16
    %v167 = vpop.permute.xlu0 %166
    %v169 = vadd.f32 %v152, %v167
    %v170 = vadd.f32 %v157, %v167
    %v171 = vld [vmem:[%s3] sm:$0xf]
    %v172 = vld [vmem:[%s3 + $0x4] sm:$0xf]
    %v173 = vld [vmem:[%s3 + $0x8] sm:$0xf]
    %v174 = vld [vmem:[%s3 + $0xc] sm:$0xf]
    %v175 = vpack.c.bf16 %v157, %v152
    %v176 = vld [vmem:[%s1] sm:$0xff]
    %v177 = vld [vmem:[%s1 + $0x8] sm:$0xff]
    %v178 = vld [vmem:[%s1 + $0x10] sm:$0xff]
    %v179 = vld [vmem:[%s1 + $0x18] sm:$0xff]
    %v180 = vld [vmem:[%s10] sm:$0xff]
    %v182 = vsel %vm78, %v176, 0
    %v185 = vsel %vm78, %v177, 0
    %v188 = vsel %vm78, %v178, 0
    %v191 = vsel %vm78, %v179, 0
    %193 = vmatprep.subr.mxu0 0.0
    %194 = vmatpush1.msra.mxu0 %v180
    %195 = vmatprep.subr.mxu0 0.0
    %196 = vmatpush1.msra.mxu0 0.0
    %197 = vmatprep.subr.mxu0 0.0
    %198 = vmatpush1.msra.mxu0 0.0
    %199 = vmatprep.subr.mxu0 0.0
    %200 = vmatpush1.msra.mxu0 0.0
    %201 = vmatprep.subr.mxu0 0.0
    %202 = vmatpush1.msra.mxu0 0.0
    %203 = vmatprep.subr.mxu0 0.0
    %204 = vmatpush1.msra.mxu0 0.0
    %205 = vmatprep.subr.mxu0 0.0
    %206 = vmatpush1.msra.mxu0 0.0
    %207 = vmatprep.subr.mxu0 0.0
    %208 = vmatpush1.msra.mxu0 0.0
    %209 = vmatprep.subr.mxu0 0.0
    %210 = vmatpush1.msra.mxu0 0.0
    %211 = vmatprep.subr.mxu0 0.0
    %212 = vmatpush1.msra.mxu0 0.0
    %213 = vmatprep.subr.mxu0 0.0
    %214 = vmatpush1.msra.mxu0 0.0
    %215 = vmatprep.subr.mxu0 0.0
    %216 = vmatpush1.msra.mxu0 0.0
    %217 = vmatprep.subr.mxu0 0.0
    %218 = vmatpush1.msra.mxu0 0.0
    %219 = vmatprep.subr.mxu0 0.0
    %220 = vmatpush1.msra.mxu0 0.0
    %221 = vmatprep.subr.mxu0 0.0
    %222 = vmatpush1.msra.mxu0 0.0
    %223 = vmatprep.subr.mxu0 0.0
    %224 = vmatpush1.msra.mxu0 0.0
    %225 = vmatprep.subr.mxu0 0.0
    %226 = vmatpush1.msra.mxu0 0.0
    %227 = vmatprep.subr.mxu0 0.0
    %228 = vmatpush1.msra.mxu0 0.0
    %229 = vmatprep.subr.mxu0 0.0
    %230 = vmatpush1.msra.mxu0 0.0
    %231 = vmatprep.subr.mxu0 0.0
    %232 = vmatpush1.msra.mxu0 0.0
    %233 = vmatprep.subr.mxu0 0.0
    %234 = vmatpush1.msra.mxu0 0.0
    %235 = vmatprep.subr.mxu0 0.0
    %236 = vmatpush1.msra.mxu0 0.0
    %237 = vmatprep.subr.mxu0 0.0
    %238 = vmatpush1.msra.mxu0 0.0
    %239 = vmatprep.subr.mxu0 0.0
    %240 = vmatpush1.msra.mxu0 0.0
    %241 = vmatprep.subr.mxu0 0.0
    %242 = vmatpush1.msra.mxu0 0.0
    %243 = vmatprep.subr.mxu0 0.0
    %244 = vmatpush1.msra.mxu0 0.0
    %245 = vmatprep.subr.mxu0 0.0
    %246 = vmatpush1.msra.mxu0 0.0
    %247 = vmatprep.subr.mxu0 0.0
    %248 = vmatpush1.msra.mxu0 0.0
    %249 = vmatprep.subr.mxu0 0.0
    %250 = vmatpush1.msra.mxu0 0.0
    %251 = vmatprep.subr.mxu0 0.0
    %252 = vmatpush1.msra.mxu0 0.0
    %253 = vmatprep.subr.mxu0 0.0
    %254 = vmatpush1.msra.mxu0 0.0
    %255 = vmatprep.subr.mxu0 0.0
    %256 = vmatpush1.msra.mxu0 0.0
    %257 = vmatprep.mubr.f32.mxu0 0.0
    %258 = vmatmul.mubr.f32.gmra.mrb[0].mxu0 %v182
    %v259 = vpop.f32.mrb[0].mxu0
    %v260 = vadd.f32 0.0, %v259
    %v261 = vpop.f32.mrb[0].mxu0
    %262 = vmatprep.mubr.f32.mxu0 0.0
    %263 = vmatmul.mubr.f32.gmra.mrb[0].mxu0 %v185
    %v264 = vpop.f32.mrb[0].mxu0
    %v265 = vadd.f32 0.0, %v264
    %v266 = vpop.f32.mrb[0].mxu0
    %267 = vmatprep.mubr.f32.mxu0 0.0
    %268 = vmatmul.mubr.f32.gmra.mrb[0].mxu0 %v188
    %v269 = vpop.f32.mrb[0].mxu0
    %v270 = vadd.f32 0.0, %v269
    %v271 = vpop.f32.mrb[0].mxu0
    %272 = vmatprep.mubr.f32.mxu0 0.0
    %273 = vmatmul.mubr.f32.gmra.mrb[0].mxu0 %v191
    %v274 = vpop.f32.mrb[0].mxu0
    %v275 = vadd.f32 0.0, %v274
    %v276 = vpop.f32.mrb[0].mxu0
    %277 = vdwg.mxu0
    %v282 = vunpack.c.l.b16 %v171
    %v283 = vunpack.c.l.b16 %v172
    %v284 = vunpack.c.l.b16 %v173
    %v285 = vunpack.c.l.b16 %v174
    %v286 = vpack.c.b16 %v283, %v282
    %v287 = vpack.c.b16 %v285, %v284
    %vm288 = vcmask 130048
    %v290 = vsel %vm288, %v286, 0
    %v293 = vsel %vm288, %v287, 0
    %295 = vmatprep.subr.bf16.mxu0 0
    %296 = vmatpush1.bf16.msra.mxu0 %v175
    %297 = vmatprep.subr.bf16.mxu0 0
    %298 = vmatpush1.bf16.msra.mxu0 0
    %299 = vmatprep.subr.bf16.mxu0 0
    %300 = vmatpush1.bf16.msra.mxu0 0
    %301 = vmatprep.subr.bf16.mxu0 0
    %302 = vmatpush1.bf16.msra.mxu0 0
    %303 = vmatprep.subr.bf16.mxu0 0
    %304 = vmatpush1.bf16.msra.mxu0 0
    %305 = vmatprep.subr.bf16.mxu0 0
    %306 = vmatpush1.bf16.msra.mxu0 0
    %307 = vmatprep.subr.bf16.mxu0 0
    %308 = vmatpush1.bf16.msra.mxu0 0
    %309 = vmatprep.subr.bf16.mxu0 0
    %310 = vmatpush1.bf16.msra.mxu0 0
    %311 = vmatprep.subr.bf16.mxu0 0
    %312 = vmatpush1.bf16.msra.mxu0 0
    %313 = vmatprep.subr.bf16.mxu0 0
    %314 = vmatpush1.bf16.msra.mxu0 0
    %315 = vmatprep.subr.bf16.mxu0 0
    %316 = vmatpush1.bf16.msra.mxu0 0
    %317 = vmatprep.subr.bf16.mxu0 0
    %318 = vmatpush1.bf16.msra.mxu0 0
    %319 = vmatprep.subr.bf16.mxu0 0
    %320 = vmatpush1.bf16.msra.mxu0 0
    %321 = vmatprep.subr.bf16.mxu0 0
    %322 = vmatpush1.bf16.msra.mxu0 0
    %323 = vmatprep.subr.bf16.mxu0 0
    %324 = vmatpush1.bf16.msra.mxu0 0
    %325 = vmatprep.subr.bf16.mxu0 0
    %326 = vmatpush1.bf16.msra.mxu0 0
    %327 = vmatprep.mubr.bf16.mxu0 0
    %328 = vmatmul.mubr.bf16.gmra.mrb[0].mxu0 %v290
    %v329 = vpop.f32.mrb[0].mxu0
    %v330 = vadd.f32 %v260, %v329
    %v331 = vpop.f32.mrb[0].mxu0
    %v332 = vpop.f32.mrb[0].mxu0
    %v333 = vadd.f32 %v265, %v332
    %v334 = vpop.f32.mrb[0].mxu0
    %335 = vmatprep.mubr.bf16.mxu0 0
    %336 = vmatmul.mubr.bf16.gmra.mrb[0].mxu0 %v293
    %v337 = vpop.f32.mrb[0].mxu0
    %v338 = vadd.f32 %v270, %v337
    %v339 = vpop.f32.mrb[0].mxu0
    %v340 = vpop.f32.mrb[0].mxu0
    %v341 = vadd.f32 %v275, %v340
    %v342 = vpop.f32.mrb[0].mxu0
    %343 = vdwg.mxu0
    %v344 = vld [vmem:[%s11] sm:$0x1]
    %v346 = vlaneseq
    %v347 = vshrl.u32 %v346, 7
    %v348 = vsub.s32 0, %v347
    %v349 = vrot.slane %v344, %v348
    %v351 = vadd.f32 %v330, %v349
    %v352 = vadd.f32 %v333, %v349
    %v353 = vadd.f32 %v338, %v349
    %v354 = vadd.f32 %v341, %v349
    %v355 = vmax.f32 %v351, 0.0
    %v356 = vmax.f32 %v352, 0.0
    %v357 = vmax.f32 %v353, 0.0
    %v358 = vmax.f32 %v354, 0.0
    %359 = vst.msk [vmem:[%s22] sm:$0xff] %vm288, %v355
    %360 = vst.msk [vmem:[%s22 + $0x8] sm:$0xff] %vm288, %v356
    %361 = vst.msk [vmem:[%s22 + $0x10] sm:$0xff] %vm288, %v357
    %362 = vst.msk [vmem:[%s22 + $0x18] sm:$0xff] %vm288, %v358
    %v363 = vld [vmem:[%s12] sm:$0xff]
    %v364 = vld [vmem:[%s12 + $0x8] sm:$0xff]
    %v365 = vld [vmem:[%s13] sm:$0x1]
    %v367 = vlaneseq
    %v368 = vshrl.u32 %v367, 7
    %v369 = vsub.s32 0, %v368
    %v370 = vrot.slane %v365, %v369
    %v373 = vsel %vm288, %v355, 0
    %v376 = vsel %vm288, %v356, 0
    %v379 = vsel %vm288, %v357, 0
    %v382 = vsel %vm288, %v358, 0
    %384 = vmatprep.subr.mxu0 0.0
    %385 = vmatpush1.msra.mxu0 %v363
    %386 = vmatprep.subr.mxu0 0.0
    %387 = vmatpush1.msra.mxu0 %v364
    %388 = vmatprep.subr.mxu0 0.0
    %389 = vmatpush1.msra.mxu0 0.0
    %390 = vmatprep.subr.mxu0 0.0
    %391 = vmatpush1.msra.mxu0 0.0
    %392 = vmatprep.subr.mxu0 0.0
    %393 = vmatpush1.msra.mxu0 0.0
    %394 = vmatprep.subr.mxu0 0.0
    %395 = vmatpush1.msra.mxu0 0.0
    %396 = vmatprep.subr.mxu0 0.0
    %397 = vmatpush1.msra.mxu0 0.0
    %398 = vmatprep.subr.mxu0 0.0
    %399 = vmatpush1.msra.mxu0 0.0
    %400 = vmatprep.subr.mxu0 0.0
    %401 = vmatpush1.msra.mxu0 0.0
    %402 = vmatprep.subr.mxu0 0.0
    %403 = vmatpush1.msra.mxu0 0.0
    %404 = vmatprep.subr.mxu0 0.0
    %405 = vmatpush1.msra.mxu0 0.0
    %406 = vmatprep.subr.mxu0 0.0
    %407 = vmatpush1.msra.mxu0 0.0
    %408 = vmatprep.subr.mxu0 0.0
    %409 = vmatpush1.msra.mxu0 0.0
    %410 = vmatprep.subr.mxu0 0.0
    %411 = vmatpush1.msra.mxu0 0.0
    %412 = vmatprep.subr.mxu0 0.0
    %413 = vmatpush1.msra.mxu0 0.0
    %414 = vmatprep.subr.mxu0 0.0
    %415 = vmatpush1.msra.mxu0 0.0
    %416 = vmatprep.subr.mxu0 0.0
    %417 = vmatpush1.msra.mxu0 0.0
    %418 = vmatprep.subr.mxu0 0.0
    %419 = vmatpush1.msra.mxu0 0.0
    %420 = vmatprep.subr.mxu0 0.0
    %421 = vmatpush1.msra.mxu0 0.0
    %422 = vmatprep.subr.mxu0 0.0
    %423 = vmatpush1.msra.mxu0 0.0
    %424 = vmatprep.subr.mxu0 0.0
    %425 = vmatpush1.msra.mxu0 0.0
    %426 = vmatprep.subr.mxu0 0.0
    %427 = vmatpush1.msra.mxu0 0.0
    %428 = vmatprep.subr.mxu0 0.0
    %429 = vmatpush1.msra.mxu0 0.0
    %430 = vmatprep.subr.mxu0 0.0
    %431 = vmatpush1.msra.mxu0 0.0
    %432 = vmatprep.subr.mxu0 0.0
    %433 = vmatpush1.msra.mxu0 0.0
    %434 = vmatprep.subr.mxu0 0.0
    %435 = vmatpush1.msra.mxu0 0.0
    %436 = vmatprep.subr.mxu0 0.0
    %437 = vmatpush1.msra.mxu0 0.0
    %438 = vmatprep.subr.mxu0 0.0
    %439 = vmatpush1.msra.mxu0 0.0
    %440 = vmatprep.subr.mxu0 0.0
    %441 = vmatpush1.msra.mxu0 0.0
    %442 = vmatprep.subr.mxu0 0.0
    %443 = vmatpush1.msra.mxu0 0.0
    %444 = vmatprep.subr.mxu0 0.0
    %445 = vmatpush1.msra.mxu0 0.0
    %446 = vmatprep.subr.mxu0 0.0
    %447 = vmatpush1.msra.mxu0 0.0
    %448 = vmatprep.mubr.f32.mxu0 0.0
    %449 = vmatmul.mubr.f32.gmra.mrb[0].mxu0 %v373
    %v450 = vpop.f32.mrb[0].mxu0
    %v451 = vadd.f32 %v370, %v450
    %v452 = vpop.f32.mrb[0].mxu0
    %453 = vmatprep.mubr.f32.mxu0 0.0
    %454 = vmatmul.mubr.f32.gmra.mrb[0].mxu0 %v376
    %v455 = vpop.f32.mrb[0].mxu0
    %v456 = vadd.f32 %v370, %v455
    %v457 = vpop.f32.mrb[0].mxu0
    %458 = vmatprep.mubr.f32.mxu0 0.0
    %459 = vmatmul.mubr.f32.gmra.mrb[0].mxu0 %v379
    %v460 = vpop.f32.mrb[0].mxu0
    %v461 = vadd.f32 %v370, %v460
    %v462 = vpop.f32.mrb[0].mxu0
    %463 = vmatprep.mubr.f32.mxu0 0.0
    %464 = vmatmul.mubr.f32.gmra.mrb[0].mxu0 %v382
    %v465 = vpop.f32.mrb[0].mxu0
    %v466 = vadd.f32 %v370, %v465
    %v467 = vpop.f32.mrb[0].mxu0
    %468 = vdwg.mxu0
    %v469 = vld [vmem:[%s4] sm:$0xf]
    %v470 = vld [vmem:[%s4 + $0x4] sm:$0xf]
    %v471 = vld [vmem:[%s4 + $0x8] sm:$0xf]
    %v472 = vld [vmem:[%s4 + $0xc] sm:$0xf]
    %v473 = vpack.c.bf16 %v170, %v169
    %v478 = vunpack.c.l.b16 %v469
    %v479 = vunpack.c.l.b16 %v470
    %v480 = vunpack.c.l.b16 %v471
    %v481 = vunpack.c.l.b16 %v472
    %v482 = vpack.c.b16 %v479, %v478
    %v483 = vpack.c.b16 %v481, %v480
    %485 = vrot.lane.b32.xlu0 %v473, 112
    %v486 = vpop.permute.xlu0 %485
    %v489 = vsel %vm288, %v482, 0
    %v492 = vsel %vm288, %v483, 0
    %494 = vmatprep.subr.bf16.mxu0 0
    %495 = vmatpush1.bf16.msra.mxu0 %v486
    %496 = vmatprep.subr.bf16.mxu0 0
    %497 = vmatpush1.bf16.msra.mxu0 0
    %498 = vmatprep.subr.bf16.mxu0 0
    %499 = vmatpush1.bf16.msra.mxu0 0
    %500 = vmatprep.subr.bf16.mxu0 0
    %501 = vmatpush1.bf16.msra.mxu0 0
    %502 = vmatprep.subr.bf16.mxu0 0
    %503 = vmatpush1.bf16.msra.mxu0 0
    %504 = vmatprep.subr.bf16.mxu0 0
    %505 = vmatpush1.bf16.msra.mxu0 0
    %506 = vmatprep.subr.bf16.mxu0 0
    %507 = vmatpush1.bf16.msra.mxu0 0
    %508 = vmatprep.subr.bf16.mxu0 0
    %509 = vmatpush1.bf16.msra.mxu0 0
    %510 = vmatprep.subr.bf16.mxu0 0
    %511 = vmatpush1.bf16.msra.mxu0 0
    %512 = vmatprep.subr.bf16.mxu0 0
    %513 = vmatpush1.bf16.msra.mxu0 0
    %514 = vmatprep.subr.bf16.mxu0 0
    %515 = vmatpush1.bf16.msra.mxu0 0
    %516 = vmatprep.subr.bf16.mxu0 0
    %517 = vmatpush1.bf16.msra.mxu0 0
    %518 = vmatprep.subr.bf16.mxu0 0
    %519 = vmatpush1.bf16.msra.mxu0 0
    %520 = vmatprep.subr.bf16.mxu0 0
    %521 = vmatpush1.bf16.msra.mxu0 0
    %522 = vmatprep.subr.bf16.mxu0 0
    %523 = vmatpush1.bf16.msra.mxu0 0
    %524 = vmatprep.subr.bf16.mxu0 0
    %525 = vmatpush1.bf16.msra.mxu0 0
    %526 = vmatprep.mubr.bf16.mxu0 0
    %527 = vmatmul.mubr.bf16.gmra.mrb[0].mxu0 %v489
    %v528 = vpop.f32.mrb[0].mxu0
    %v529 = vadd.f32 0.0, %v528
    %v530 = vpop.f32.mrb[0].mxu0
    %v531 = vpop.f32.mrb[0].mxu0
    %v532 = vadd.f32 0.0, %v531
    %v533 = vpop.f32.mrb[0].mxu0
    %534 = vmatprep.mubr.bf16.mxu0 0
    %535 = vmatmul.mubr.bf16.gmra.mrb[0].mxu0 %v492
    %v536 = vpop.f32.mrb[0].mxu0
    %v537 = vadd.f32 0.0, %v536
    %v538 = vpop.f32.mrb[0].mxu0
    %v539 = vpop.f32.mrb[0].mxu0
    %v540 = vadd.f32 0.0, %v539
    %v541 = vpop.f32.mrb[0].mxu0
    %542 = vdwg.mxu0
    %v543 = vmul.f32 %v529, %v451
    %v544 = vmul.f32 %v532, %v456
    %v545 = vmul.f32 %v537, %v461
    %v546 = vmul.f32 %v540, %v466
    %v547 = vsel %vm288, %v543, 0.0
    %548 = vadd.xlane.f32.xlu0 %v547
    %v549 = vpop.xlane.xlu0 %548
    %v550 = vsel %vm288, %v544, 0.0
    %551 = vadd.xlane.f32.xlu0 %v550
    %v552 = vpop.xlane.xlu0 %551
    %v553 = vsel %vm288, %v545, 0.0
    %554 = vadd.xlane.f32.xlu0 %v553
    %v555 = vpop.xlane.xlu0 %554
    %v556 = vsel %vm288, %v546, 0.0
    %557 = vadd.xlane.f32.xlu0 %v556
    %v558 = vpop.xlane.xlu0 %557
    %v559 = vmax.f32 %v549, %v552
    %v560 = vmax.f32 %v555, %v558
    %v561 = vmax.f32 %v559, %v560
    %v562 = vrot.slane %v561, 4
    %v563 = vmax.f32 %v561, %v562
    %v564 = vrot.slane %v563, 2
    %v565 = vmax.f32 %v563, %v564
    %v566 = vrot.slane %v565, 1
    %v567 = vmax.f32 %v565, %v566
    %v568 = vsub.f32 %v549, %v567
    %v569 = vsub.f32 %v552, %v567
    %v570 = vsub.f32 %v555, %v567
    %v571 = vsub.f32 %v558, %v567
    %v572 = vmul.f32 %v568, 1.442695
    %v573 = vpow.pop %v572
    %v574 = vmul.f32 %v569, 1.442695
    %v575 = vpow.pop %v574
    %v576 = vmul.f32 %v570, 1.442695
    %v577 = vpow.pop %v576
    %v578 = vmul.f32 %v571, 1.442695
    %v579 = vpow.pop %v578
    %v580 = vmul.f32 %v355, %v573
    %v581 = vmul.f32 %v356, %v575
    %v582 = vmul.f32 %v357, %v577
    %v583 = vmul.f32 %v358, %v579
    %588 = vrot.lane.b32.xlu0 %v580, 1
    %v589 = vpop.permute.xlu0 %588
    %590 = vrot.lane.b32.xlu0 %v581, 1
    %v591 = vpop.permute.xlu0 %590
    %592 = vrot.lane.b32.xlu0 %v582, 1
    %v593 = vpop.permute.xlu0 %592
    %594 = vrot.lane.b32.xlu0 %v583, 1
    %v595 = vpop.permute.xlu0 %594
    %vm600 = vcmask 7168
    %v601 = vsel %vm600, %v573, %v589
    %v602 = vsel %vm600, %v575, %v591
    %v603 = vsel %vm600, %v577, %v593
    %v604 = vsel %vm600, %v579, %v595
    %v605 = vld [vmem:[%s5] sm:$0xf]
    %v606 = vld [vmem:[%s5 + $0x4] sm:$0xf]
    %v607 = vpack.c.bf16 %v602, %v601
    %v608 = vpack.c.bf16 %v604, %v603
    %v611 = vunpack.c.l.b16 %v605
    %v612 = vunpack.c.l.b16 %v606
    %v613 = vpack.c.b16 %v612, %v611
    %vm614 = vcmask 261120
    %v616 = vsel %vm614, %v613, 0
    %618 = vmatprep.subr.bf16.mxu0 0
    %619 = vmatpush1.bf16.msra.mxu0 %v607
    %620 = vmatprep.subr.bf16.mxu0 0
    %621 = vmatpush1.bf16.msra.mxu0 %v608
    %622 = vmatprep.subr.bf16.mxu0 0
    %623 = vmatpush1.bf16.msra.mxu0 0
    %624 = vmatprep.subr.bf16.mxu0 0
    %625 = vmatpush1.bf16.msra.mxu0 0
    %626 = vmatprep.subr.bf16.mxu0 0
    %627 = vmatpush1.bf16.msra.mxu0 0
    %628 = vmatprep.subr.bf16.mxu0 0
    %629 = vmatpush1.bf16.msra.mxu0 0
    %630 = vmatprep.subr.bf16.mxu0 0
    %631 = vmatpush1.bf16.msra.mxu0 0
    %632 = vmatprep.subr.bf16.mxu0 0
    %633 = vmatpush1.bf16.msra.mxu0 0
    %634 = vmatprep.subr.bf16.mxu0 0
    %635 = vmatpush1.bf16.msra.mxu0 0
    %636 = vmatprep.subr.bf16.mxu0 0
    %637 = vmatpush1.bf16.msra.mxu0 0
    %638 = vmatprep.subr.bf16.mxu0 0
    %639 = vmatpush1.bf16.msra.mxu0 0
    %640 = vmatprep.subr.bf16.mxu0 0
    %641 = vmatpush1.bf16.msra.mxu0 0
    %642 = vmatprep.subr.bf16.mxu0 0
    %643 = vmatpush1.bf16.msra.mxu0 0
    %644 = vmatprep.subr.bf16.mxu0 0
    %645 = vmatpush1.bf16.msra.mxu0 0
    %646 = vmatprep.subr.bf16.mxu0 0
    %647 = vmatpush1.bf16.msra.mxu0 0
    %648 = vmatprep.subr.bf16.mxu0 0
    %649 = vmatpush1.bf16.msra.mxu0 0
    %650 = vmatprep.mubr.bf16.mxu0 0
    %651 = vmatmul.mubr.bf16.gmra.mrb[0].mxu0 %v616
    %v652 = vpop.f32.mrb[0].mxu0
    %v653 = vadd.f32 0.0, %v652
    %v654 = vpop.f32.mrb[0].mxu0
    %v655 = vpop.f32.mrb[0].mxu0
    %v656 = vadd.f32 0.0, %v655
    %v657 = vpop.f32.mrb[0].mxu0
    %658 = vdwg.mxu0
    %v659 = vadd.f32 %v653, 1e-16
    %v660 = vadd.f32 %v656, 1e-16
    %v661 = vrcp.pop %v659
    %v662 = vrcp.pop %v660
    %664 = vset.pattern.permute.xlu0 0
    %665 = vperm.xlu0 %664, %v661
    %v666 = vpop.permute.xlu0 %665
    %669 = vset.pattern.permute.xlu0 0
    %670 = vperm.xlu0 %669, %v662
    %v671 = vpop.permute.xlu0 %670
    %v673 = vmul.f32 %v653, %v666
    %v674 = vmul.f32 %v656, %v671
    %v675 = vld [vmem:[%s16] sm:$0xff]
    %v677 = vsel %vm78, %v76, 0
    %679 = vmatprep.subr.mxu0 0.0
    %680 = vmatpush1.msra.mxu0 %v675
    %681 = vmatprep.subr.mxu0 0.0
    %682 = vmatpush1.msra.mxu0 0.0
    %683 = vmatprep.subr.mxu0 0.0
    %684 = vmatpush1.msra.mxu0 0.0
    %685 = vmatprep.subr.mxu0 0.0
    %686 = vmatpush1.msra.mxu0 0.0
    %687 = vmatprep.subr.mxu0 0.0
    %688 = vmatpush1.msra.mxu0 0.0
    %689 = vmatprep.subr.mxu0 0.0
    %690 = vmatpush1.msra.mxu0 0.0
    %691 = vmatprep.subr.mxu0 0.0
    %692 = vmatpush1.msra.mxu0 0.0
    %693 = vmatprep.subr.mxu0 0.0
    %694 = vmatpush1.msra.mxu0 0.0
    %695 = vmatprep.subr.mxu0 0.0
    %696 = vmatpush1.msra.mxu0 0.0
    %697 = vmatprep.subr.mxu0 0.0
    %698 = vmatpush1.msra.mxu0 0.0
    %699 = vmatprep.subr.mxu0 0.0
    %700 = vmatpush1.msra.mxu0 0.0
    %701 = vmatprep.subr.mxu0 0.0
    %702 = vmatpush1.msra.mxu0 0.0
    %703 = vmatprep.subr.mxu0 0.0
    %704 = vmatpush1.msra.mxu0 0.0
    %705 = vmatprep.subr.mxu0 0.0
    %706 = vmatpush1.msra.mxu0 0.0
    %707 = vmatprep.subr.mxu0 0.0
    %708 = vmatpush1.msra.mxu0 0.0
    %709 = vmatprep.subr.mxu0 0.0
    %710 = vmatpush1.msra.mxu0 0.0
    %711 = vmatprep.subr.mxu0 0.0
    %712 = vmatpush1.msra.mxu0 0.0
    %713 = vmatprep.subr.mxu0 0.0
    %714 = vmatpush1.msra.mxu0 0.0
    %715 = vmatprep.subr.mxu0 0.0
    %716 = vmatpush1.msra.mxu0 0.0
    %717 = vmatprep.subr.mxu0 0.0
    %718 = vmatpush1.msra.mxu0 0.0
    %719 = vmatprep.subr.mxu0 0.0
    %720 = vmatpush1.msra.mxu0 0.0
    %721 = vmatprep.subr.mxu0 0.0
    %722 = vmatpush1.msra.mxu0 0.0
    %723 = vmatprep.subr.mxu0 0.0
    %724 = vmatpush1.msra.mxu0 0.0
    %725 = vmatprep.subr.mxu0 0.0
    %726 = vmatpush1.msra.mxu0 0.0
    %727 = vmatprep.subr.mxu0 0.0
    %728 = vmatpush1.msra.mxu0 0.0
    %729 = vmatprep.subr.mxu0 0.0
    %730 = vmatpush1.msra.mxu0 0.0
    %731 = vmatprep.subr.mxu0 0.0
    %732 = vmatpush1.msra.mxu0 0.0
    %733 = vmatprep.subr.mxu0 0.0
    %734 = vmatpush1.msra.mxu0 0.0
    %735 = vmatprep.subr.mxu0 0.0
    %736 = vmatpush1.msra.mxu0 0.0
    %737 = vmatprep.subr.mxu0 0.0
    %738 = vmatpush1.msra.mxu0 0.0
    %739 = vmatprep.subr.mxu0 0.0
    %740 = vmatpush1.msra.mxu0 0.0
    %741 = vmatprep.subr.mxu0 0.0
    %742 = vmatpush1.msra.mxu0 0.0
    %743 = vmatprep.mubr.f32.mxu0 0.0
    %744 = vmatmul.mubr.f32.gmra.mrb[0].mxu0 %v677
    %v745 = vpop.f32.mrb[0].mxu0
    %v746 = vadd.f32 0.0, %v745
    %v747 = vpop.f32.mrb[0].mxu0
    %748 = vdwg.mxu0
    %v749 = vld [vmem:[%s6] sm:$0xf]
    %v750 = vld [vmem:[%s6 + $0x4] sm:$0xf]
    %v751 = vpack.c.bf16 %v746, %v746
    %v754 = vunpack.c.l.b16 %v749
    %v755 = vunpack.c.l.b16 %v750
    %v756 = vpack.c.b16 %v755, %v754
    %vm757 = vcmask 15360
    %v759 = vsel %vm757, %v756, 0
    %vm761 = vcmask 1040384
    %v763 = vsel %vm761, %v751, 0
    %765 = vmatprep.subr.bf16.mxu0 0
    %766 = vmatpush1.bf16.msra.mxu0 %v763
    %767 = vmatprep.subr.bf16.mxu0 0
    %768 = vmatpush1.bf16.msra.mxu0 0
    %769 = vmatprep.subr.bf16.mxu0 0
    %770 = vmatpush1.bf16.msra.mxu0 0
    %771 = vmatprep.subr.bf16.mxu0 0
    %772 = vmatpush1.bf16.msra.mxu0 0
    %773 = vmatprep.subr.bf16.mxu0 0
    %774 = vmatpush1.bf16.msra.mxu0 0
    %775 = vmatprep.subr.bf16.mxu0 0
    %776 = vmatpush1.bf16.msra.mxu0 0
    %777 = vmatprep.subr.bf16.mxu0 0
    %778 = vmatpush1.bf16.msra.mxu0 0
    %779 = vmatprep.subr.bf16.mxu0 0
    %780 = vmatpush1.bf16.msra.mxu0 0
    %781 = vmatprep.subr.bf16.mxu0 0
    %782 = vmatpush1.bf16.msra.mxu0 0
    %783 = vmatprep.subr.bf16.mxu0 0
    %784 = vmatpush1.bf16.msra.mxu0 0
    %785 = vmatprep.subr.bf16.mxu0 0
    %786 = vmatpush1.bf16.msra.mxu0 0
    %787 = vmatprep.subr.bf16.mxu0 0
    %788 = vmatpush1.bf16.msra.mxu0 0
    %789 = vmatprep.subr.bf16.mxu0 0
    %790 = vmatpush1.bf16.msra.mxu0 0
    %791 = vmatprep.subr.bf16.mxu0 0
    %792 = vmatpush1.bf16.msra.mxu0 0
    %793 = vmatprep.subr.bf16.mxu0 0
    %794 = vmatpush1.bf16.msra.mxu0 0
    %795 = vmatprep.subr.bf16.mxu0 0
    %796 = vmatpush1.bf16.msra.mxu0 0
    %797 = vmatprep.mubr.bf16.mxu0 0
    %798 = vmatmul.mubr.bf16.gmra.mrb[0].mxu0 %v759
    %v799 = vpop.f32.mrb[0].mxu0
    %v800 = vadd.f32 0.0, %v799
    %v801 = vpop.f32.mrb[0].mxu0
    %v802 = vpop.f32.mrb[0].mxu0
    %v803 = vadd.f32 0.0, %v802
    %v804 = vpop.f32.mrb[0].mxu0
    %805 = vdwg.mxu0
    %v806 = vld [vmem:[%s15] sm:$0xff]
    %v807 = vld [vmem:[%s15 + $0x8] sm:$0xff]
    %810 = vrot.lane.b32.xlu0 %v673, 127
    %v811 = vpop.permute.xlu0 %810
    %812 = vrot.lane.b32.xlu0 %v674, 127
    %v813 = vpop.permute.xlu0 %812
    %v814 = vsel %vm288, %v811, 0
    %v816 = vsel %vm288, %v813, 0
    %818 = vmatprep.subr.mxu0 0.0
    %819 = vmatpush1.msra.mxu0 %v806
    %820 = vmatprep.subr.mxu0 0.0
    %821 = vmatpush1.msra.mxu0 %v807
    %822 = vmatprep.subr.mxu0 0.0
    %823 = vmatpush1.msra.mxu0 0.0
    %824 = vmatprep.subr.mxu0 0.0
    %825 = vmatpush1.msra.mxu0 0.0
    %826 = vmatprep.subr.mxu0 0.0
    %827 = vmatpush1.msra.mxu0 0.0
    %828 = vmatprep.subr.mxu0 0.0
    %829 = vmatpush1.msra.mxu0 0.0
    %830 = vmatprep.subr.mxu0 0.0
    %831 = vmatpush1.msra.mxu0 0.0
    %832 = vmatprep.subr.mxu0 0.0
    %833 = vmatpush1.msra.mxu0 0.0
    %834 = vmatprep.subr.mxu0 0.0
    %835 = vmatpush1.msra.mxu0 0.0
    %836 = vmatprep.subr.mxu0 0.0
    %837 = vmatpush1.msra.mxu0 0.0
    %838 = vmatprep.subr.mxu0 0.0
    %839 = vmatpush1.msra.mxu0 0.0
    %840 = vmatprep.subr.mxu0 0.0
    %841 = vmatpush1.msra.mxu0 0.0
    %842 = vmatprep.subr.mxu0 0.0
    %843 = vmatpush1.msra.mxu0 0.0
    %844 = vmatprep.subr.mxu0 0.0
    %845 = vmatpush1.msra.mxu0 0.0
    %846 = vmatprep.subr.mxu0 0.0
    %847 = vmatpush1.msra.mxu0 0.0
    %848 = vmatprep.subr.mxu0 0.0
    %849 = vmatpush1.msra.mxu0 0.0
    %850 = vmatprep.subr.mxu0 0.0
    %851 = vmatpush1.msra.mxu0 0.0
    %852 = vmatprep.subr.mxu0 0.0
    %853 = vmatpush1.msra.mxu0 0.0
    %854 = vmatprep.subr.mxu0 0.0
    %855 = vmatpush1.msra.mxu0 0.0
    %856 = vmatprep.subr.mxu0 0.0
    %857 = vmatpush1.msra.mxu0 0.0
    %858 = vmatprep.subr.mxu0 0.0
    %859 = vmatpush1.msra.mxu0 0.0
    %860 = vmatprep.subr.mxu0 0.0
    %861 = vmatpush1.msra.mxu0 0.0
    %862 = vmatprep.subr.mxu0 0.0
    %863 = vmatpush1.msra.mxu0 0.0
    %864 = vmatprep.subr.mxu0 0.0
    %865 = vmatpush1.msra.mxu0 0.0
    %866 = vmatprep.subr.mxu0 0.0
    %867 = vmatpush1.msra.mxu0 0.0
    %868 = vmatprep.subr.mxu0 0.0
    %869 = vmatpush1.msra.mxu0 0.0
    %870 = vmatprep.subr.mxu0 0.0
    %871 = vmatpush1.msra.mxu0 0.0
    %872 = vmatprep.subr.mxu0 0.0
    %873 = vmatpush1.msra.mxu0 0.0
    %874 = vmatprep.subr.mxu0 0.0
    %875 = vmatpush1.msra.mxu0 0.0
    %876 = vmatprep.subr.mxu0 0.0
    %877 = vmatpush1.msra.mxu0 0.0
    %878 = vmatprep.subr.mxu0 0.0
    %879 = vmatpush1.msra.mxu0 0.0
    %880 = vmatprep.subr.mxu0 0.0
    %881 = vmatpush1.msra.mxu0 0.0
    %882 = vmatprep.mubr.f32.mxu0 0.0
    %883 = vmatmul.mubr.f32.gmra.mrb[0].mxu0 %v814
    %v884 = vpop.f32.mrb[0].mxu0
    %v885 = vadd.f32 0.0, %v884
    %v886 = vpop.f32.mrb[0].mxu0
    %887 = vmatprep.mubr.f32.mxu0 0.0
    %888 = vmatmul.mubr.f32.gmra.mrb[0].mxu0 %v816
    %v889 = vpop.f32.mrb[0].mxu0
    %v890 = vadd.f32 0.0, %v889
    %v891 = vpop.f32.mrb[0].mxu0
    %892 = vdwg.mxu0
    %895 = vrot.lane.b32.xlu0 %v885, 32
    %v896 = vpop.permute.xlu0 %895
    %897 = vrot.lane.b32.xlu0 %v890, 32
    %v898 = vpop.permute.xlu0 %897
    %v901 = vadd.f32 %v152, %v896
    %v902 = vadd.f32 %v157, %v898
    %905 = vrot.lane.b32.xlu0 %v800, 32
    %v906 = vpop.permute.xlu0 %905
    %907 = vrot.lane.b32.xlu0 %v803, 32
    %v908 = vpop.permute.xlu0 %907
    %v911 = vadd.f32 %v901, %v906
    %v912 = vadd.f32 %v902, %v908
    %v913 = vld [vmem:[%s17] sm:$0x1]
    %v915 = vlaneseq
    %v916 = vshrl.u32 %v915, 7
    %v917 = vsub.s32 0, %v916
    %v918 = vrot.slane %v913, %v917
    %919 = vrot.lane.b32.xlu0 %v918, 32
    %v920 = vpop.permute.xlu0 %919
    %v922 = vadd.f32 %v911, %v920
    %v923 = vadd.f32 %v912, %v920
    %v924 = vmax.f32 %v922, 0.0
    %v925 = vmax.f32 %v923, 0.0
    %928 = vrot.lane.b32.xlu0 %v924, 96
    %v929 = vpop.permute.xlu0 %928
    %930 = vrot.lane.b32.xlu0 %v925, 96
    %v931 = vpop.permute.xlu0 %930
    %934 = vst.msk [vmem:[#allocation2] sm:$0xff] %vm288, %v929
    %935 = vst.msk [vmem:[#allocation2 + $0x8] sm:$0xff] %vm288, %v931
    %v936 = vld [vmem:[%s7] sm:$0x1]
    %v937 = vpack.c.bf16 %v925, %v924
    %939 = vrot.lane.b32.xlu0 %v937, 96
    %v940 = vpop.permute.xlu0 %939
    %v943 = vsel %vm288, %v936, 0
    %945 = vmatprep.subr.bf16.mxu0 0
    %946 = vmatpush1.bf16.msra.mxu0 %v940
    %947 = vmatprep.subr.bf16.mxu0 0
    %948 = vmatpush1.bf16.msra.mxu0 0
    %949 = vmatprep.subr.bf16.mxu0 0
    %950 = vmatpush1.bf16.msra.mxu0 0
    %951 = vmatprep.subr.bf16.mxu0 0
    %952 = vmatpush1.bf16.msra.mxu0 0
    %953 = vmatprep.subr.bf16.mxu0 0
    %954 = vmatpush1.bf16.msra.mxu0 0
    %955 = vmatprep.subr.bf16.mxu0 0
    %956 = vmatpush1.bf16.msra.mxu0 0
    %957 = vmatprep.subr.bf16.mxu0 0
    %958 = vmatpush1.bf16.msra.mxu0 0
    %959 = vmatprep.subr.bf16.mxu0 0
    %960 = vmatpush1.bf16.msra.mxu0 0
    %961 = vmatprep.subr.bf16.mxu0 0
    %962 = vmatpush1.bf16.msra.mxu0 0
    %963 = vmatprep.subr.bf16.mxu0 0
    %964 = vmatpush1.bf16.msra.mxu0 0
    %965 = vmatprep.subr.bf16.mxu0 0
    %966 = vmatpush1.bf16.msra.mxu0 0
    %967 = vmatprep.subr.bf16.mxu0 0
    %968 = vmatpush1.bf16.msra.mxu0 0
    %969 = vmatprep.subr.bf16.mxu0 0
    %970 = vmatpush1.bf16.msra.mxu0 0
    %971 = vmatprep.subr.bf16.mxu0 0
    %972 = vmatpush1.bf16.msra.mxu0 0
    %973 = vmatprep.subr.bf16.mxu0 0
    %974 = vmatpush1.bf16.msra.mxu0 0
    %975 = vmatprep.subr.bf16.mxu0 0
    %976 = vmatpush1.bf16.msra.mxu0 0
    %977 = vmatprep.mubr.bf16.mxu0 0
    %978 = vmatmul.mubr.bf16.gmra.mrb[0].mxu0 %v943
    %v979 = vpop.f32.mrb[0].mxu0
    %v980 = vadd.f32 0.0, %v979
    %v981 = vpop.f32.mrb[0].mxu0
    %v982 = vpop.f32.mrb[0].mxu0
    %v983 = vpop.f32.mrb[0].mxu0
    %984 = vdwg.mxu0
    %v985 = vld [vmem:[%s8] sm:$0x3]
    %987 = vset.pattern.permute.xlu0 0
    %988 = vperm.xlu0 %987, %v985
    %v989 = vpop.permute.xlu0 %988
    %v991 = vmul.f32 %v980, %v989
    %v992 = vld [vmem:[%s18] sm:$0xff]
    %v993 = vld [vmem:[%s19] sm:$0xff]
    %v994 = vld [vmem:[%s19 + $0x8] sm:$0xff]
    %v996 = vsel %vm288, %v991, 0
    %998 = vmatprep.subr.mxu0 0.0
    %999 = vmatpush1.msra.mxu0 %v993
    %1000 = vmatprep.subr.mxu0 0.0
    %1001 = vmatpush1.msra.mxu0 %v994
    %1002 = vmatprep.subr.mxu0 0.0
    %1003 = vmatpush1.msra.mxu0 0.0
    %1004 = vmatprep.subr.mxu0 0.0
    %1005 = vmatpush1.msra.mxu0 0.0
    %1006 = vmatprep.subr.mxu0 0.0
    %1007 = vmatpush1.msra.mxu0 0.0
    %1008 = vmatprep.subr.mxu0 0.0
    %1009 = vmatpush1.msra.mxu0 0.0
    %1010 = vmatprep.subr.mxu0 0.0
    %1011 = vmatpush1.msra.mxu0 0.0
    %1012 = vmatprep.subr.mxu0 0.0
    %1013 = vmatpush1.msra.mxu0 0.0
    %1014 = vmatprep.subr.mxu0 0.0
    %1015 = vmatpush1.msra.mxu0 0.0
    %1016 = vmatprep.subr.mxu0 0.0
    %1017 = vmatpush1.msra.mxu0 0.0
    %1018 = vmatprep.subr.mxu0 0.0
    %1019 = vmatpush1.msra.mxu0 0.0
    %1020 = vmatprep.subr.mxu0 0.0
    %1021 = vmatpush1.msra.mxu0 0.0
    %1022 = vmatprep.subr.mxu0 0.0
    %1023 = vmatpush1.msra.mxu0 0.0
    %1024 = vmatprep.subr.mxu0 0.0
    %1025 = vmatpush1.msra.mxu0 0.0
    %1026 = vmatprep.subr.mxu0 0.0
    %1027 = vmatpush1.msra.mxu0 0.0
    %1028 = vmatprep.subr.mxu0 0.0
    %1029 = vmatpush1.msra.mxu0 0.0
    %1030 = vmatprep.subr.mxu0 0.0
    %1031 = vmatpush1.msra.mxu0 0.0
    %1032 = vmatprep.subr.mxu0 0.0
    %1033 = vmatpush1.msra.mxu0 0.0
    %1034 = vmatprep.subr.mxu0 0.0
    %1035 = vmatpush1.msra.mxu0 0.0
    %1036 = vmatprep.subr.mxu0 0.0
    %1037 = vmatpush1.msra.mxu0 0.0
    %1038 = vmatprep.subr.mxu0 0.0
    %1039 = vmatpush1.msra.mxu0 0.0
    %1040 = vmatprep.subr.mxu0 0.0
    %1041 = vmatpush1.msra.mxu0 0.0
    %1042 = vmatprep.subr.mxu0 0.0
    %1043 = vmatpush1.msra.mxu0 0.0
    %1044 = vmatprep.subr.mxu0 0.0
    %1045 = vmatpush1.msra.mxu0 0.0
    %1046 = vmatprep.subr.mxu0 0.0
    %1047 = vmatpush1.msra.mxu0 0.0
    %1048 = vmatprep.subr.mxu0 0.0
    %1049 = vmatpush1.msra.mxu0 0.0
    %1050 = vmatprep.subr.mxu0 0.0
    %1051 = vmatpush1.msra.mxu0 0.0
    %1052 = vmatprep.subr.mxu0 0.0
    %1053 = vmatpush1.msra.mxu0 0.0
    %1054 = vmatprep.subr.mxu0 0.0
    %1055 = vmatpush1.msra.mxu0 0.0
    %1056 = vmatprep.subr.mxu0 0.0
    %1057 = vmatpush1.msra.mxu0 0.0
    %1058 = vmatprep.subr.mxu0 0.0
    %1059 = vmatpush1.msra.mxu0 0.0
    %1060 = vmatprep.subr.mxu0 0.0
    %1061 = vmatpush1.msra.mxu0 0.0
    %1062 = vmatprep.mubr.f32.mxu0 0.0
    %1063 = vmatmul.mubr.f32.gmra.mrb[0].mxu0 %v996
    %v1064 = vpop.f32.mrb[0].mxu0
    %v1065 = vadd.f32 0.0, %v1064
    %v1066 = vpop.f32.mrb[0].mxu0
    %1067 = vdwg.mxu0
    %1068 = vmatprep.subr.mxu0 0.0
    %1069 = vmatpush1.msra.mxu0 %v992
    %1070 = vmatprep.subr.mxu0 0.0
    %1071 = vmatpush1.msra.mxu0 0.0
    %1072 = vmatprep.subr.mxu0 0.0
    %1073 = vmatpush1.msra.mxu0 0.0
    %1074 = vmatprep.subr.mxu0 0.0
    %1075 = vmatpush1.msra.mxu0 0.0
    %1076 = vmatprep.subr.mxu0 0.0
    %1077 = vmatpush1.msra.mxu0 0.0
    %1078 = vmatprep.subr.mxu0 0.0
    %1079 = vmatpush1.msra.mxu0 0.0
    %1080 = vmatprep.subr.mxu0 0.0
    %1081 = vmatpush1.msra.mxu0 0.0
    %1082 = vmatprep.subr.mxu0 0.0
    %1083 = vmatpush1.msra.mxu0 0.0
    %1084 = vmatprep.subr.mxu0 0.0
    %1085 = vmatpush1.msra.mxu0 0.0
    %1086 = vmatprep.subr.mxu0 0.0
    %1087 = vmatpush1.msra.mxu0 0.0
    %1088 = vmatprep.subr.mxu0 0.0
    %1089 = vmatpush1.msra.mxu0 0.0
    %1090 = vmatprep.subr.mxu0 0.0
    %1091 = vmatpush1.msra.mxu0 0.0
    %1092 = vmatprep.subr.mxu0 0.0
    %1093 = vmatpush1.msra.mxu0 0.0
    %1094 = vmatprep.subr.mxu0 0.0
    %1095 = vmatpush1.msra.mxu0 0.0
    %1096 = vmatprep.subr.mxu0 0.0
    %1097 = vmatpush1.msra.mxu0 0.0
    %1098 = vmatprep.subr.mxu0 0.0
    %1099 = vmatpush1.msra.mxu0 0.0
    %1100 = vmatprep.subr.mxu0 0.0
    %1101 = vmatpush1.msra.mxu0 0.0
    %1102 = vmatprep.subr.mxu0 0.0
    %1103 = vmatpush1.msra.mxu0 0.0
    %1104 = vmatprep.subr.mxu0 0.0
    %1105 = vmatpush1.msra.mxu0 0.0
    %1106 = vmatprep.subr.mxu0 0.0
    %1107 = vmatpush1.msra.mxu0 0.0
    %1108 = vmatprep.subr.mxu0 0.0
    %1109 = vmatpush1.msra.mxu0 0.0
    %1110 = vmatprep.subr.mxu0 0.0
    %1111 = vmatpush1.msra.mxu0 0.0
    %1112 = vmatprep.subr.mxu0 0.0
    %1113 = vmatpush1.msra.mxu0 0.0
    %1114 = vmatprep.subr.mxu0 0.0
    %1115 = vmatpush1.msra.mxu0 0.0
    %1116 = vmatprep.subr.mxu0 0.0
    %1117 = vmatpush1.msra.mxu0 0.0
    %1118 = vmatprep.subr.mxu0 0.0
    %1119 = vmatpush1.msra.mxu0 0.0
    %1120 = vmatprep.subr.mxu0 0.0
    %1121 = vmatpush1.msra.mxu0 0.0
    %1122 = vmatprep.subr.mxu0 0.0
    %1123 = vmatpush1.msra.mxu0 0.0
    %1124 = vmatprep.subr.mxu0 0.0
    %1125 = vmatpush1.msra.mxu0 0.0
    %1126 = vmatprep.subr.mxu0 0.0
    %1127 = vmatpush1.msra.mxu0 0.0
    %1128 = vmatprep.subr.mxu0 0.0
    %1129 = vmatpush1.msra.mxu0 0.0
    %1130 = vmatprep.subr.mxu0 0.0
    %1131 = vmatpush1.msra.mxu0 0.0
    %1132 = vmatprep.mubr.f32.mxu0 0.0
    %1133 = vmatmul.mubr.f32.gmra.mrb[0].mxu0 %v677
    %v1134 = vpop.f32.mrb[0].mxu0
    %v1135 = vadd.f32 %v1065, %v1134
    %v1136 = vpop.f32.mrb[0].mxu0
    %1137 = vdwg.mxu0
    %v1138 = vld [vmem:[%s20] sm:$0x1]
    %v1140 = vlaneseq
    %v1141 = vshrl.u32 %v1140, 7
    %v1142 = vsub.s32 0, %v1141
    %v1143 = vrot.slane %v1138, %v1142
    %v1145 = vadd.f32 %v1135, %v1143
    %v1146 = vmax.f32 %v1145, 0.0
    %vm1147 = vcmask 58368
    %1148 = vst.msk [vmem:[#allocation4] sm:$0x3] %vm1147, %v1146
    // Predicated region
    $region86: #{tpu_custom_call.1} parent=1 // pred_check
      _
    $region87: #{tpu_custom_call.1} parent=1 // pred_check_branch
      %1150 = sbr.rel (0) target = $region89
    $region88: #{tpu_custom_call.1} parent=1 // pred_region
      %s1152 = ssub.s32 256, 256
      %1153 = vsyncadd [#allocation3], %s1152
      %s1154 = sshll.u32 [#allocation2], 4
      %s1155 = int_to_ptr.vmem [resolvable:$true] %s1154
      %1160 = dma.vmem_to_hbm [thread:$0]  %s1155, 256, %s21, [#allocation3], 128, 128, 8
    $region89: #{tpu_custom_call.1} parent=1 // pred_fallthru
      _
    // Predicated region
    $region90: #{tpu_custom_call.1} parent=1 // pred_check
      _
    $region91: #{tpu_custom_call.1} parent=1 // pred_check_branch
      %1162 = sbr.rel (0) target = $region93
    $region92: #{tpu_custom_call.1} parent=1 // pred_region
      _
    $region93: #{tpu_custom_call.1} parent=1 // pred_fallthru
      _
    // Predicated region
    $region94: #{tpu_custom_call.1} parent=1 // pred_check
      _
    $region95: #{tpu_custom_call.1} parent=1 // pred_check_branch
      %1164 = sbr.rel (0) target = $region97
    $region96: #{tpu_custom_call.1} parent=1 // pred_region
      %s1166 = ssub.s32 32, 32
      %1167 = vsyncadd [#allocation5], %s1166
      %s1169 = sshll.u32 [#allocation4], 4
      %s1170 = int_to_ptr.vmem [resolvable:$true] %s1169
      %1172 = dma.vmem_to_hbm [thread:$0]  %s1170, 32, %s23, [#allocation5]
    $region97: #{tpu_custom_call.1} parent=1 // pred_fallthru
      _
    // Predicated region
    $region98: #{tpu_custom_call.1} parent=1 // pred_check
      _
    $region99: #{tpu_custom_call.1} parent=1 // pred_check_branch
      %1174 = sbr.rel (0) target = $region101
    $region100: #{tpu_custom_call.1} parent=1 // pred_region
      %1175 = dma.done [#allocation3], 256
    $region101: #{tpu_custom_call.1} parent=1 // pred_fallthru
      _
    // Predicated region
    $region102: #{tpu_custom_call.1} parent=1 // pred_check
      _
    $region103: #{tpu_custom_call.1} parent=1 // pred_check_branch
      %1177 = sbr.rel (0) target = $region105
    $region104: #{tpu_custom_call.1} parent=1 // pred_region
      _
    $region105: #{tpu_custom_call.1} parent=1 // pred_fallthru
      _
    // Predicated region
    $region106: #{tpu_custom_call.1} parent=1 // pred_check
      _
    $region107: #{tpu_custom_call.1} parent=1 // pred_check_branch
      %1179 = sbr.rel (0) target = $region109
    $region108: #{tpu_custom_call.1} parent=1 // pred_region
      %1180 = dma.done [#allocation5], 32
    $region109: #{tpu_custom_call.1} parent=1 // pred_fallthru
      _
    %1181 = vsyncpa [#allocation3], 1
    %1182 = vsyncpa [#allocation5], 1

</llo_original>
